<compile_context>
chip_gen: v6e
topology: v6e:2x2x1
jax: 0.10.0
libtpu: 0.0.40
codegen_flags: <defaults>
</compile_context>

<pallas_src>
import jax
import jax.numpy as jnp
from jax.experimental import pallas as pl
from jax.experimental.pallas import tpu as pltpu


def _rup(a, m):
    return (a + m - 1) // m * m


def _vmem_capacity_bytes():
    try:
        cap = getattr(pltpu.get_tpu_info(), "vmem_capacity_bytes", None)
        if cap:
            return int(cap)
    except Exception:
        pass
    return 64 * 2**20  # conservative default (v7x per-core VMEM)


def _padded_bytes_2d(rows, cols, dtype_bytes=4):
    return _rup(rows, 8) * _rup(cols, 128) * dtype_bytes


def _softmax_axis0(v):
    m = jnp.max(v, axis=0, keepdims=True)
    e = jnp.exp(v - m)
    s = jnp.sum(e, axis=0, keepdims=True)
    # Approximate reciprocal runs on the EUP slot (otherwise idle) instead of the VALU.
    return e * pl.reciprocal(s, approx=True)


def _make_kernel(cn_p, matmul_dtype):
    """Kernel over one (batch, N-tile) grid point.  Only N-scaled work remains here."""

    def kernel(x_ref, wc_ref, cit_ref, m_ref, mask_ref, shift_ref, out_ref):
        x = x_ref[0]              # (C, TILE_N)      N is lane-dense
        wc = wc_ref[...]          # (mid, C)         convc weight
        ci_t = cit_ref[0]         # (Ct, mid)        [ci_a | ci_b]^T, zero-padded rows
        M = m_ref[0]              # (C, Ct)          folded convd/convn/convl + BN scale
        mask = mask_ref[...]      # (Ct, 1)          0 for real rows, -1e30 for pad rows
        shift = shift_ref[...]    # (C, 1)           BN shift

        md = matmul_dtype
        # convc: (mid, N)
        xc = jnp.dot(wc.astype(md), x.astype(md), preferred_element_type=jnp.float32)
        # Fused score matmul: (Ct, N); pad rows forced to -1e30 before the group softmaxes.
        s = jnp.dot(ci_t.astype(md), xc.astype(md),
                    preferred_element_type=jnp.float32) + mask
        att = jnp.concatenate(
            [_softmax_axis0(s[:cn_p]),   # softmax over curve_num  (first group)
             _softmax_axis0(s[cn_p:])],  # softmax over curve_len  (second group)
            axis=0)                                                   # (Ct, N)
        # Folded second stage + convd + BN scale: one (C, Ct) x (Ct, N) matmul.
        d = jnp.dot(M.astype(md), att.astype(md), preferred_element_type=jnp.float32)
        y = x + d + shift
        out_ref[0] = jnp.where(y >= 0, y, 0.2 * y)                    # leaky_relu(0.2)

    return kernel


def _precompute_curve_side(curves, params, cn_p, cl_p):
    """N-independent curve-side block, hoisted to plain JAX (runs once per call)."""
    w_att, wa, wb, _wc, wn, wl, wd, bn_scale, _bn_shift = params
    mid = wa.shape[0]

    att = jnp.einsum('c,bcnl->bnl', w_att[:, 0], curves)                  # line_conv_att
    sm_inter = jax.nn.softmax(att, axis=-1)
    sm_intra = jax.nn.softmax(att, axis=-2)
    curver_inter = jnp.einsum('bcnl,bnl->bcn', curves, sm_inter)          # (B, C, Cn)
    curves_intra = jnp.einsum('bcnl,bnl->bcl', curves, sm_intra)          # (B, C, Cl)

    ci_a = jnp.einsum('mc,bcn->bmn', wa, curver_inter)                    # conva (B, mid, Cn)
    ci_b = jnp.einsum('mc,bcl->bml', wb, curves_intra)                    # convb (B, mid, Cl)
    m_inter = jnp.einsum('pm,bmn->bpn', wn, ci_a)                         # convn
    m_intra = jnp.einsum('pm,bml->bpl', wl, ci_b)                         # convl
    M_a = jnp.einsum('om,bmn->bon', wd[:, :mid], m_inter)                 # convd (inter half)
    M_b = jnp.einsum('om,bml->bol', wd[:, mid:], m_intra)                 # convd (intra half)

    def pad_last(a, target):
        pad = target - a.shape[-1]
        return jnp.pad(a, ((0, 0), (0, 0), (0, pad))) if pad else a

    ci_cat = jnp.concatenate([pad_last(ci_a, cn_p), pad_last(ci_b, cl_p)], axis=-1)
    ci_t = jnp.swapaxes(ci_cat, 1, 2)                                     # (B, Ct, mid)
    M_cat = jnp.concatenate([pad_last(M_a, cn_p), pad_last(M_b, cl_p)], axis=-1)
    M_cat = M_cat * bn_scale[None, :, :]                                  # fold BN scale
    return ci_t, M_cat


def _pick_tile_n(n_work, c, mid, ct, vmem_cap):
    budget = int(0.4 * vmem_cap)          # headroom for weights / pipeline / compiler scratch
    c8, mid8, ct8 = _rup(c, 8), _rup(mid, 8), _rup(ct, 8)
    # live f32 bytes per lane: x + out (double-buffered) + xc + s + att + d
    per_lane = 4 * (2 * c8 + 2 * c8 + mid8 + 2 * ct8 + c8)
    for t in (1024, 512, 256, 128):       # 512-1024 already reaches ~85% of HBM roofline
        if n_work % t == 0 and per_lane * t <= budget:
            return t
    return n_work                          # small / awkward N: single full-width tile


def curve_aggregation(x, curves, params, matmul_dtype=jnp.float32):
    """x: (B, C, N) f32, curves: (B, C, Cn, Cl) f32."""
    w_att, wa, wb, wc, wn, wl, wd, bn_scale, bn_shift = params
    B, C, N = x.shape
    _, _, Cn, Cl = curves.shape
    mid = wa.shape[0]

    cn_p, cl_p = _rup(Cn, 8), _rup(Cl, 8)
    ct = cn_p + cl_p

    # ---- N-independent curve-side block (hoisted out of the kernel) ---------------------
    ci_t, M_cat = _precompute_curve_side(curves, params, cn_p, cl_p)
    row = jnp.arange(ct)[:, None]
    is_pad = ((row >= Cn) & (row < cn_p)) | (row >= cn_p + Cl)
    mask_bias = jnp.where(is_pad, jnp.float32(-1e30), jnp.float32(0.0))   # (Ct, 1)

    # ---- lane-align N if needed ----------------------------------------------------------
    if N >= 128 and N % 128 != 0:
        n_work = _rup(N, 128)
        x_in = jnp.pad(x, ((0, 0), (0, 0), (0, n_work - N)))
    else:
        n_work, x_in = N, x

    vmem_cap = _vmem_capacity_bytes()
    tile_n = _pick_tile_n(n_work, C, mid, ct, vmem_cap)
    n_tiles = n_work // tile_n

    # ---- VMEM budget from (8,128)-padded shapes ------------------------------------------
    est = (4 * _padded_bytes_2d(C, tile_n)            # x + out tiles, double-buffered
           + 2 * _padded_bytes_2d(mid, C)             # wc
           + 2 * _padded_bytes_2d(ct, mid)            # ci_t
           + 2 * _padded_bytes_2d(C, ct)              # M
           + 2 * _padded_bytes_2d(ct, 1)              # mask
           + 2 * _padded_bytes_2d(C, 1)               # shift
           + _padded_bytes_2d(mid, tile_n)            # xc
           + 2 * _padded_bytes_2d(ct, tile_n)         # s, att
           + _padded_bytes_2d(C, tile_n))             # d
    vmem_limit = int(min(0.9 * vmem_cap, max(32 * 2**20, 2 * est)))

    kernel = _make_kernel(cn_p, matmul_dtype)

    grid_spec = pltpu.PrefetchScalarGridSpec(
        num_scalar_prefetch=0,
        grid=(B, n_tiles),
        in_specs=[
            pl.BlockSpec((1, C, tile_n), lambda b, t: (b, 0, t)),     # x
            pl.BlockSpec(wc.shape, lambda b, t: (0, 0)),              # wc
            pl.BlockSpec((1, ct, mid), lambda b, t: (b, 0, 0)),       # ci_t
            pl.BlockSpec((1, C, ct), lambda b, t: (b, 0, 0)),         # M (scale folded)
            pl.BlockSpec((ct, 1), lambda b, t: (0, 0)),               # pad-row mask
            pl.BlockSpec((C, 1), lambda b, t: (0, 0)),                # BN shift
        ],
        out_specs=pl.BlockSpec((1, C, tile_n), lambda b, t: (b, 0, t)),
    )

    out = pl.pallas_call(
        kernel,
        out_shape=jax.ShapeDtypeStruct((B, C, n_work), jnp.float32),
        grid_spec=grid_spec,
        compiler_params=pltpu.CompilerParams(
            dimension_semantics=("parallel", "parallel"),
            vmem_limit_bytes=vmem_limit),
    )(x_in, wc, ci_t, M_cat, mask_bias, bn_shift)

    return out[:, :, :N] if n_work != N else out


def reference(x, curves, params):
    """Pure-JAX reference mirroring the PyTorch forward (inference-mode BN)."""
    w_att, wa, wb, wc, wn, wl, wd, bn_scale, bn_shift = params
    att = jnp.einsum('c,bcnl->bnl', w_att[:, 0], curves)[:, None, :, :]     # (B,1,Cn,Cl)
    curver_inter = jnp.sum(curves * jax.nn.softmax(att, axis=-1), axis=-1)  # (B,C,Cn)
    curves_intra = jnp.sum(curves * jax.nn.softmax(att, axis=-2), axis=-2)  # (B,C,Cl)
    ci_a = jnp.einsum('mc,bck->bmk', wa, curver_inter)
    ci_b = jnp.einsum('mc,bcl->bml', wb, curves_intra)
    x_logits = jnp.einsum('mc,bcn->bnm', wc, x)
    x_inter = jax.nn.softmax(jnp.einsum('bnm,bmk->bnk', x_logits, ci_a), axis=-1)
    x_intra = jax.nn.softmax(jnp.einsum('bnm,bml->bnl', x_logits, ci_b), axis=-1)
    cn_feat = jnp.einsum('pm,bmk->bkp', wn, ci_a)
    cl_feat = jnp.einsum('pm,bml->blp', wl, ci_b)
    xi = jnp.einsum('bnk,bkp->bnp', x_inter, cn_feat)
    xt = jnp.einsum('bnl,blp->bnp', x_intra, cl_feat)
    cf = jnp.concatenate([xi, xt], axis=-1)                                 # (B,N,2*mid)
    d = jnp.einsum('oc,bnc->bon', wd, cf)
    d = d * bn_scale[None] + bn_shift[None]
    y = x + d
    return jnp.where(y >= 0, y, 0.2 * y)


def make_params(key, in_channel):
    mid = in_channel // 2
    ks = jax.random.split(key, 11)
    w_att = jax.random.normal(ks[0], (in_channel, 1), jnp.float32) * 0.2   # Conv2d(C,1,1)
    wa = jax.random.normal(ks[1], (mid, in_channel), jnp.float32) * 0.2
    wb = jax.random.normal(ks[2], (mid, in_channel), jnp.float32) * 0.2
    wc = jax.random.normal(ks[3], (mid, in_channel), jnp.float32) * 0.2
    wn = jax.random.normal(ks[4], (mid, mid), jnp.float32) * 0.2
    wl = jax.random.normal(ks[5], (mid, mid), jnp.float32) * 0.2
    wd = jax.random.normal(ks[6], (in_channel, 2 * mid), jnp.float32) * 0.2
    # BatchNorm1d(in_channel), inference mode, folded into scale/shift.
    gamma = 1.0 + 0.1 * jax.random.normal(ks[7], (in_channel,), jnp.float32)
    beta = 0.1 * jax.random.normal(ks[8], (in_channel,), jnp.float32)
    running_mean = 0.1 * jax.random.normal(ks[9], (in_channel,), jnp.float32)
    running_var = jax.random.uniform(ks[10], (in_channel,), jnp.float32, 0.5, 1.5)
    eps = 1e-5
    scale = gamma / jnp.sqrt(running_var + eps)
    shift = beta - running_mean * scale
    return (w_att, wa, wb, wc, wn, wl, wd,
            scale.reshape(in_channel, 1), shift.reshape(in_channel, 1))


if __name__ == "__main__":
    # Small but representative: N large enough to exercise multi-tile grid, Cn/Cl chosen so
    # the sublane padding / mask path is exercised (real CurveNet uses curve_num=100, len=5).
    B, C, N = 2, 8, 2048
    Cn, Cl = 10, 5
    key = jax.random.PRNGKey(0)
    kx, kc, kp = jax.random.split(key, 3)

    x = jax.random.normal(kx, (B, C, N), jnp.float32)
    curves = jax.random.normal(kc, (B, C, Cn, Cl), jnp.float32)
    params = make_params(kp, C)

    fn = jax.jit(lambda xx, cc: curve_aggregation(xx, cc, params))
    out = jax.block_until_ready(fn(x, curves))

    ref = jax.block_until_ready(reference(x, curves, params))
    assert out.shape == (B, C, N)
    # Tolerance accounts for the EUP approximate-reciprocal softmax normalization.
    assert jnp.allclose(out, ref, atol=2e-3, rtol=2e-3), (
        f"max abs err {jnp.max(jnp.abs(out - ref))}")
    print("KERNEL_OK")
</pallas_src>

<mosaic_0001>
module attributes {stable_mosaic.version = 11 : i64} {
  func.func @kernel(%arg0: i32, %arg1: i32, %arg2: memref<1x8x1024xf32, #tpu.memory_space<vmem>>, %arg3: memref<4x8xf32, #tpu.memory_space<vmem>>, %arg4: memref<1x24x4xf32, #tpu.memory_space<vmem>>, %arg5: memref<1x8x24xf32, #tpu.memory_space<vmem>>, %arg6: memref<24x1xf32, #tpu.memory_space<vmem>>, %arg7: memref<8x1xf32, #tpu.memory_space<vmem>>, %arg8: memref<1x8x1024xf32, #tpu.memory_space<vmem>>) attributes {dimension_semantics = [#tpu.dimension_semantics<parallel>, #tpu.dimension_semantics<parallel>], iteration_bounds = array<i64: 2, 2>, scalar_prefetch = 0 : i64, scratch_operands = 0 : i64, tpu.core_type = #tpu.core_type<tc>, window_params = [{transform_indices = @transform_0, window_bounds = array<i64: 1, 8, 1024>}, {pipeline_mode = #tpu.pipeline_mode<synchronous>, transform_indices = @transform_1, window_bounds = array<i64: 4, 8>}, {transform_indices = @transform_2, window_bounds = array<i64: 1, 24, 4>}, {transform_indices = @transform_3, window_bounds = array<i64: 1, 8, 24>}, {pipeline_mode = #tpu.pipeline_mode<synchronous>, transform_indices = @transform_4, window_bounds = array<i64: 24, 1>}, {pipeline_mode = #tpu.pipeline_mode<synchronous>, transform_indices = @transform_5, window_bounds = array<i64: 8, 1>}, {transform_indices = @transform_6, window_bounds = array<i64: 1, 8, 1024>}]} {
    %c0 = arith.constant 0 : index
    %c0_0 = arith.constant 0 : index
    %c0_1 = arith.constant 0 : index
    %0 = vector.load %arg2[%c0, %c0_0, %c0_1] : memref<1x8x1024xf32, #tpu.memory_space<vmem>>, vector<1x8x1024xf32>
    %1 = vector.shape_cast %0 : vector<1x8x1024xf32> to vector<8x1024xf32>
    %c0_2 = arith.constant 0 : index
    %c0_3 = arith.constant 0 : index
    %2 = vector.load %arg3[%c0_2, %c0_3] : memref<4x8xf32, #tpu.memory_space<vmem>>, vector<4x8xf32>
    %c0_4 = arith.constant 0 : index
    %c0_5 = arith.constant 0 : index
    %c0_6 = arith.constant 0 : index
    %3 = vector.load %arg4[%c0_4, %c0_5, %c0_6] : memref<1x24x4xf32, #tpu.memory_space<vmem>>, vector<1x24x4xf32>
    %4 = vector.shape_cast %3 : vector<1x24x4xf32> to vector<24x4xf32>
    %c0_7 = arith.constant 0 : index
    %c0_8 = arith.constant 0 : index
    %c0_9 = arith.constant 0 : index
    %5 = vector.load %arg5[%c0_7, %c0_8, %c0_9] : memref<1x8x24xf32, #tpu.memory_space<vmem>>, vector<1x8x24xf32>
    %6 = vector.shape_cast %5 : vector<1x8x24xf32> to vector<8x24xf32>
    %c0_10 = arith.constant 0 : index
    %c0_11 = arith.constant 0 : index
    %7 = vector.load %arg6[%c0_10, %c0_11] : memref<24x1xf32, #tpu.memory_space<vmem>>, vector<24x1xf32>
    %c0_12 = arith.constant 0 : index
    %c0_13 = arith.constant 0 : index
    %8 = vector.load %arg7[%c0_12, %c0_13] : memref<8x1xf32, #tpu.memory_space<vmem>>, vector<8x1xf32>
    %cst = arith.constant dense<0.000000e+00> : vector<4x1024xf32>
    %9 = tpu.matmul %2, %1, %cst {dimension_numbers = #tpu.dot_dimension_numbers<[1], [0], [0], [1], [0, 0, 1, 1], [], []>} : vector<4x8xf32>, vector<8x1024xf32>, vector<4x1024xf32> -> vector<4x1024xf32>
    %cst_14 = arith.constant dense<0.000000e+00> : vector<24x1024xf32>
    %10 = tpu.matmul %4, %9, %cst_14 {dimension_numbers = #tpu.dot_dimension_numbers<[1], [0], [0], [1], [0, 0, 1, 1], [], []>} : vector<24x4xf32>, vector<4x1024xf32>, vector<24x1024xf32> -> vector<24x1024xf32>
    %11 = vector.broadcast %7 : vector<24x1xf32> to vector<24x1024xf32>
    %12 = arith.addf %10, %11 : vector<24x1024xf32>
    %13 = vector.extract_strided_slice %12 {offsets = [0, 0], sizes = [16, 1024], strides = [1, 1]} : vector<24x1024xf32> to vector<16x1024xf32>
    %cst_15 = arith.constant dense<0xFF800000> : vector<1024xf32>
    %14 = vector.multi_reduction <maximumf>, %13, %cst_15 [0] : vector<16x1024xf32> to vector<1024xf32>
    %15 = vector.shape_cast %14 : vector<1024xf32> to vector<1x1024xf32>
    %16 = vector.broadcast %15 : vector<1x1024xf32> to vector<16x1024xf32>
    %17 = arith.subf %13, %16 : vector<16x1024xf32>
    %18 = math.exp %17 : vector<16x1024xf32>
    %cst_16 = arith.constant dense<0.000000e+00> : vector<1024xf32>
    %19 = vector.multi_reduction <add>, %18, %cst_16 [0] : vector<16x1024xf32> to vector<1024xf32>
    %20 = vector.shape_cast %19 : vector<1024xf32> to vector<1x1024xf32>
    %21 = tpu.reciprocal %20 {approx = true} : vector<1x1024xf32> -> vector<1x1024xf32>
    %22 = vector.broadcast %21 : vector<1x1024xf32> to vector<16x1024xf32>
    %23 = arith.mulf %18, %22 : vector<16x1024xf32>
    %24 = vector.extract_strided_slice %12 {offsets = [16, 0], sizes = [8, 1024], strides = [1, 1]} : vector<24x1024xf32> to vector<8x1024xf32>
    %cst_17 = arith.constant dense<0xFF800000> : vector<1024xf32>
    %25 = vector.multi_reduction <maximumf>, %24, %cst_17 [0] : vector<8x1024xf32> to vector<1024xf32>
    %26 = vector.shape_cast %25 : vector<1024xf32> to vector<1x1024xf32>
    %27 = vector.broadcast %26 : vector<1x1024xf32> to vector<8x1024xf32>
    %28 = arith.subf %24, %27 : vector<8x1024xf32>
    %29 = math.exp %28 : vector<8x1024xf32>
    %cst_18 = arith.constant dense<0.000000e+00> : vector<1024xf32>
    %30 = vector.multi_reduction <add>, %29, %cst_18 [0] : vector<8x1024xf32> to vector<1024xf32>
    %31 = vector.shape_cast %30 : vector<1024xf32> to vector<1x1024xf32>
    %32 = tpu.reciprocal %31 {approx = true} : vector<1x1024xf32> -> vector<1x1024xf32>
    %33 = vector.broadcast %32 : vector<1x1024xf32> to vector<8x1024xf32>
    %34 = arith.mulf %29, %33 : vector<8x1024xf32>
    %35 = tpu.concatenate %23, %34 in 0 : vector<16x1024xf32>, vector<8x1024xf32> -> vector<24x1024xf32>
    %cst_19 = arith.constant dense<0.000000e+00> : vector<8x1024xf32>
    %36 = tpu.matmul %6, %35, %cst_19 {dimension_numbers = #tpu.dot_dimension_numbers<[1], [0], [0], [1], [0, 0, 1, 1], [], []>} : vector<8x24xf32>, vector<24x1024xf32>, vector<8x1024xf32> -> vector<8x1024xf32>
    %37 = arith.addf %1, %36 : vector<8x1024xf32>
    %38 = vector.broadcast %8 : vector<8x1xf32> to vector<8x1024xf32>
    %39 = arith.addf %37, %38 : vector<8x1024xf32>
    %cst_20 = arith.constant 0.000000e+00 : f32
    %40 = vector.broadcast %cst_20 : f32 to vector<8x1024xf32>
    %41 = arith.cmpf oge, %39, %40 : vector<8x1024xf32>
    %cst_21 = arith.constant 2.000000e-01 : f32
    %42 = vector.broadcast %cst_21 : f32 to vector<8x1024xf32>
    %43 = arith.mulf %42, %39 : vector<8x1024xf32>
    %44 = arith.select %41, %39, %43 : vector<8x1024xi1>, vector<8x1024xf32>
    %c0_22 = arith.constant 0 : index
    %c0_23 = arith.constant 0 : index
    %c0_24 = arith.constant 0 : index
    %45 = vector.load %arg8[%c0_22, %c0_23, %c0_24] : memref<1x8x1024xf32, #tpu.memory_space<vmem>>, vector<1x8x1024xf32>
    %46 = vector.shape_cast %45 : vector<1x8x1024xf32> to vector<8x1024xf32>
    %47 = vector.shape_cast %44 : vector<8x1024xf32> to vector<1x8x1024xf32>
    tpu.vector_store %arg8[%c0_22, %c0_23, %c0_24], %47 {strides = array<i32>} : memref<1x8x1024xf32, #tpu.memory_space<vmem>>, vector<1x8x1024xf32>,
    return
  }
  func.func @transform_0(%arg0: i32, %arg1: i32) -> (i32, i32, i32) {
    %c0_i32 = arith.constant 0 : i32
    %c0_i32_0 = arith.constant 0 : i32
    return %arg0, %c0_i32, %arg1 : i32, i32, i32
  }
  func.func @transform_1(%arg0: i32, %arg1: i32) -> (i32, i32) {
    %c0_i32 = arith.constant 0 : i32
    %c0_i32_0 = arith.constant 0 : i32
    %c0_i32_1 = arith.constant 0 : i32
    return %c0_i32, %c0_i32_0 : i32, i32
  }
  func.func @transform_2(%arg0: i32, %arg1: i32) -> (i32, i32, i32) {
    %c0_i32 = arith.constant 0 : i32
    %c0_i32_0 = arith.constant 0 : i32
    %c0_i32_1 = arith.constant 0 : i32
    return %arg0, %c0_i32, %c0_i32_0 : i32, i32, i32
  }
  func.func @transform_3(%arg0: i32, %arg1: i32) -> (i32, i32, i32) {
    %c0_i32 = arith.constant 0 : i32
    %c0_i32_0 = arith.constant 0 : i32
    %c0_i32_1 = arith.constant 0 : i32
    return %arg0, %c0_i32, %c0_i32_0 : i32, i32, i32
  }
  func.func @transform_4(%arg0: i32, %arg1: i32) -> (i32, i32) {
    %c0_i32 = arith.constant 0 : i32
    %c0_i32_0 = arith.constant 0 : i32
    %c0_i32_1 = arith.constant 0 : i32
    return %c0_i32, %c0_i32_0 : i32, i32
  }
  func.func @transform_5(%arg0: i32, %arg1: i32) -> (i32, i32) {
    %c0_i32 = arith.constant 0 : i32
    %c0_i32_0 = arith.constant 0 : i32
    %c0_i32_1 = arith.constant 0 : i32
    return %c0_i32, %c0_i32_0 : i32, i32
  }
  func.func @transform_6(%arg0: i32, %arg1: i32) -> (i32, i32, i32) {
    %c0_i32 = arith.constant 0 : i32
    %c0_i32_0 = arith.constant 0 : i32
    return %arg0, %c0_i32, %arg1 : i32, i32, i32
  }
}

</mosaic_0001>

<llo_original>
// kernel: _lambda_.1
$region0: #{_lambda_.1}
  #allocation0 [shape = 'u32[]', space=smem, size = 0x4, offset = 0x4, fixed_abs, tag = 'smem constant byte address 0x4 - core index']
  #allocation1 [shape = 'u32[144,128]{1,0:T(1,128)}', space=vmem, size = 0x12000, scoped, tag = 'internal scratch']
  %s0 = inlined_call_operand.vmem [shape: f32[2,8,2048], index: 0, kind: input, shape index: {}]
  %s1 = inlined_call_operand.vmem [shape: f32[4,8], index: 1, kind: input, shape index: {}]
  %s2 = inlined_call_operand.vmem [shape: f32[2,24,4], index: 2, kind: input, shape index: {}]
  %s3 = inlined_call_operand.vmem [shape: f32[2,8,24], index: 3, kind: input, shape index: {}]
  %s4 = inlined_call_operand.vmem [shape: f32[24,1], index: 4, kind: input, shape index: {}]
  %s5 = inlined_call_operand.vmem [shape: f32[8,1], index: 5, kind: input, shape index: {}]
  %s6 = inlined_call_operand.hbm [shape: f32[2,8,2048], index: 6, kind: output, shape index: {}]
  %s7 = sld [smem:[#allocation0]]
  $region57: #{_lambda_.1} parent=0
    _
  %s9 = ssub.s32 1, %s7
  %s10 = scalar_select 0, %s9, %s7
  $region1: #{_lambda_.1} parent=0
    #allocation2 [shape = 'u8[65536]{0}', space=vmem, size = 0x10000, scoped, tag = 'output window, operand 0']
    #allocation3 [shape = 's32[2]{0}', space=sflag, size = 0x8, scoped, tag = 'scoped memory for _lambda_.1']
    %11 = vsyncpa [#allocation3], 0
    %s12 = scalar_lea.sflag [#allocation3], 1
    %13 = vsyncpa %s12, 0
    loop: start=0, step=1, limit=6
    $region2: #{_lambda_.1} parent=1 // loop_pre_header
      _
    $region3: #{_lambda_.1} parent=1 // loop_header
      %s15 = sphi 0, %s19
      %p16 = scmp.ge.s32.totalorder %s15, 6
      %s22 = sphi 0, %s34
      %s23 = sphi 0, %s30
      %s24 = sphi 0, %s22
      %s25 = sphi 0, %s23
      %s26 = sphi 0, %s24
      %s27 = sphi 0, %s25
      %s39 = sphi 0, %s41
      %s42 = sphi 0, %s39
      %s43 = sphi 0, %s42
      %s59 = sphi 0, %s43
      %s63 = sphi 0, %s63
      %s65 = sphi 0, %s63
      %s66 = sphi 0, %s65
      %s80 = sphi 0, %s66
      %s86 = sphi 0, %s88
      %s89 = sphi 0, %s86
      %s90 = sphi 0, %s89
      %s106 = sphi 0, %s90
      %s112 = sphi 0, %s114
      %s115 = sphi 0, %s112
      %s116 = sphi 0, %s115
      %s132 = sphi 0, %s116
      %s136 = sphi 0, %s136
      %s138 = sphi 0, %s136
      %s139 = sphi 0, %s138
      %s153 = sphi 0, %s139
      %s157 = sphi 0, %s157
      %s159 = sphi 0, %s157
      %s160 = sphi 0, %s159
      %s174 = sphi 0, %s160
      %s182 = sphi 0, %s184
      %s185 = sphi 0, %s182
      %s186 = sphi 0, %s185
      %s202 = sphi 0, %s186
    $region4: #{_lambda_.1} parent=1 // loop_header_branch
      %18 = sbr.rel (%p16) target = $region8
    $region5: #{_lambda_.1} parent=1 // loop_body
      %s20 = ssub.s32 %s15, 1
      %s21 = ssub.s32 %s15, 2
      %s28 = sadd.s32 1, %s23
      %p29 = scmp.ge.s32.totalorder %s28, 2
      %s30 = scalar_select %p29, 0, %s28
      %s31 = sadd.s32 1, %s22
      %s32 = scalar_select %p29, %s31, %s22
      %p33 = scmp.ge.s32.totalorder %s32, 2
      %s34 = scalar_select %p33, 0, %s32
      %s35 = ssub.s32 %s22, %s34
      %s36 = ssub.s32 %s23, %s30
      %s37 = sor.u32 %s35, %s36
      %p38 = scmp.eq.s32.totalorder %s37, 0
      %s40 = sadd.s32 %s39, 1
      %s41 = scalar_select %p38, %s39, %s40
      %p44 = pneg %p38
      %p45 = scmp.eq.s32.totalorder %s15, 3
      %p46 = por %p44, %p45
      %p47 = scmp.ne.s32.totalorder %s39, %s42
      %p48 = scmp.eq.s32.totalorder %s15, 0
      %p49 = por %p47, %p48
      %p50 = scmp.ne.s32.totalorder %s39, %s42
      %p51 = scmp.eq.s32.totalorder %s20, 3
      %p52 = por %p50, %p51
      %p53 = scmp.ne.s32.totalorder %s42, %s43
      %p54 = scmp.eq.s32.totalorder %s20, 0
      %p55 = por %p53, %p54
      %p56 = scmp.ne.s32.totalorder %s42, %s43
      %p57 = scmp.eq.s32.totalorder %s21, 3
      %p58 = por %p56, %p57
      %p60 = scmp.ne.s32.totalorder %s43, %s59
      %p61 = scmp.eq.s32.totalorder %s21, 0
      %p62 = por %p60, %p61
      %s64 = sadd.s32 %s63, 1
      %p67 = scmp.eq.s32.totalorder %s15, 3
      %p68 = scmp.ne.s32.totalorder %s63, %s65
      %p69 = scmp.eq.s32.totalorder %s15, 0
      %p70 = por %p68, %p69
      %p71 = scmp.ne.s32.totalorder %s63, %s65
      %p72 = scmp.eq.s32.totalorder %s20, 3
      %p73 = por %p71, %p72
      %p74 = scmp.ne.s32.totalorder %s65, %s66
      %p75 = scmp.eq.s32.totalorder %s20, 0
      %p76 = por %p74, %p75
      %p77 = scmp.ne.s32.totalorder %s65, %s66
      %p78 = scmp.eq.s32.totalorder %s21, 3
      %p79 = por %p77, %p78
      %p81 = scmp.ne.s32.totalorder %s66, %s80
      %p82 = scmp.eq.s32.totalorder %s21, 0
      %p83 = por %p81, %p82
      %s84 = ssub.s32 %s22, %s34
      %p85 = scmp.eq.s32.totalorder %s84, 0
      %s87 = sadd.s32 %s86, 1
      %s88 = scalar_select %p85, %s86, %s87
      %p91 = pneg %p85
      %p92 = scmp.eq.s32.totalorder %s15, 3
      %p93 = por %p91, %p92
      %p94 = scmp.ne.s32.totalorder %s86, %s89
      %p95 = scmp.eq.s32.totalorder %s15, 0
      %p96 = por %p94, %p95
      %p97 = scmp.ne.s32.totalorder %s86, %s89
      %p98 = scmp.eq.s32.totalorder %s20, 3
      %p99 = por %p97, %p98
      %p100 = scmp.ne.s32.totalorder %s89, %s90
      %p101 = scmp.eq.s32.totalorder %s20, 0
      %p102 = por %p100, %p101
      %p103 = scmp.ne.s32.totalorder %s89, %s90
      %p104 = scmp.eq.s32.totalorder %s21, 3
      %p105 = por %p103, %p104
      %p107 = scmp.ne.s32.totalorder %s90, %s106
      %p108 = scmp.eq.s32.totalorder %s21, 0
      %p109 = por %p107, %p108
      %s110 = ssub.s32 %s22, %s34
      %p111 = scmp.eq.s32.totalorder %s110, 0
      %s113 = sadd.s32 %s112, 1
      %s114 = scalar_select %p111, %s112, %s113
      %p117 = pneg %p111
      %p118 = scmp.eq.s32.totalorder %s15, 3
      %p119 = por %p117, %p118
      %p120 = scmp.ne.s32.totalorder %s112, %s115
      %p121 = scmp.eq.s32.totalorder %s15, 0
      %p122 = por %p120, %p121
      %p123 = scmp.ne.s32.totalorder %s112, %s115
      %p124 = scmp.eq.s32.totalorder %s20, 3
      %p125 = por %p123, %p124
      %p126 = scmp.ne.s32.totalorder %s115, %s116
      %p127 = scmp.eq.s32.totalorder %s20, 0
      %p128 = por %p126, %p127
      %p129 = scmp.ne.s32.totalorder %s115, %s116
      %p130 = scmp.eq.s32.totalorder %s21, 3
      %p131 = por %p129, %p130
      %p133 = scmp.ne.s32.totalorder %s116, %s132
      %p134 = scmp.eq.s32.totalorder %s21, 0
      %p135 = por %p133, %p134
      %s137 = sadd.s32 %s136, 1
      %p140 = scmp.eq.s32.totalorder %s15, 3
      %p141 = scmp.ne.s32.totalorder %s136, %s138
      %p142 = scmp.eq.s32.totalorder %s15, 0
      %p143 = por %p141, %p142
      %p144 = scmp.ne.s32.totalorder %s136, %s138
      %p145 = scmp.eq.s32.totalorder %s20, 3
      %p146 = por %p144, %p145
      %p147 = scmp.ne.s32.totalorder %s138, %s139
      %p148 = scmp.eq.s32.totalorder %s20, 0
      %p149 = por %p147, %p148
      %p150 = scmp.ne.s32.totalorder %s138, %s139
      %p151 = scmp.eq.s32.totalorder %s21, 3
      %p152 = por %p150, %p151
      %p154 = scmp.ne.s32.totalorder %s139, %s153
      %p155 = scmp.eq.s32.totalorder %s21, 0
      %p156 = por %p154, %p155
      %s158 = sadd.s32 %s157, 1
      %p161 = scmp.eq.s32.totalorder %s15, 3
      %p162 = scmp.ne.s32.totalorder %s157, %s159
      %p163 = scmp.eq.s32.totalorder %s15, 0
      %p164 = por %p162, %p163
      %p165 = scmp.ne.s32.totalorder %s157, %s159
      %p166 = scmp.eq.s32.totalorder %s20, 3
      %p167 = por %p165, %p166
      %p168 = scmp.ne.s32.totalorder %s159, %s160
      %p169 = scmp.eq.s32.totalorder %s20, 0
      %p170 = por %p168, %p169
      %p171 = scmp.ne.s32.totalorder %s159, %s160
      %p172 = scmp.eq.s32.totalorder %s21, 3
      %p173 = por %p171, %p172
      %p175 = scmp.ne.s32.totalorder %s160, %s174
      %p176 = scmp.eq.s32.totalorder %s21, 0
      %p177 = por %p175, %p176
      %s178 = ssub.s32 %s22, %s34
      %s179 = ssub.s32 %s23, %s30
      %s180 = sor.u32 %s178, %s179
      %p181 = scmp.eq.s32.totalorder %s180, 0
      %s183 = sadd.s32 %s182, 1
      %s184 = scalar_select %p181, %s182, %s183
      %p187 = pneg %p181
      %p188 = scmp.eq.s32.totalorder %s15, 3
      %p189 = por %p187, %p188
      %p190 = scmp.ne.s32.totalorder %s182, %s185
      %p191 = scmp.eq.s32.totalorder %s15, 0
      %p192 = por %p190, %p191
      %p193 = scmp.ne.s32.totalorder %s182, %s185
      %p194 = scmp.eq.s32.totalorder %s20, 3
      %p195 = por %p193, %p194
      %p196 = scmp.ne.s32.totalorder %s185, %s186
      %p197 = scmp.eq.s32.totalorder %s20, 0
      %p198 = por %p196, %p197
      %p199 = scmp.ne.s32.totalorder %s185, %s186
      %p200 = scmp.eq.s32.totalorder %s21, 3
      %p201 = por %p199, %p200
      %p203 = scmp.ne.s32.totalorder %s186, %s202
      %p204 = scmp.eq.s32.totalorder %s21, 0
      %p205 = por %p203, %p204
      %p206 = scmp.le.s32.totalorder 1, %s15
      %p207 = scmp.lt.s32.totalorder %s15, 5
      %p208 = pnand %p206, %p207
      %p209 = pneg %p208
      // Predicated region
      $region9: #{_lambda_.1} parent=5 // pred_check
        _
      $region10: #{_lambda_.1} parent=5 // pred_check_branch
        %211 = sbr.rel (%p208) target = $region12
      $region11: #{_lambda_.1} parent=5 // pred_region
        %s212 = ssub.s32 %s15, 1
        // Predicated region
        $region13: #{_lambda_.1} parent=11 // pred_check
          %p213 = pneg %p76
        $region14: #{_lambda_.1} parent=11 // pred_check_branch
          %215 = sbr.rel (%p213) target = $region16
        $region15: #{_lambda_.1} parent=11 // pred_region
          _
        $region16: #{_lambda_.1} parent=11 // pred_fallthru
          _
        // Predicated region
        $region17: #{_lambda_.1} parent=11 // pred_check
          %p216 = pneg %p149
        $region18: #{_lambda_.1} parent=11 // pred_check_branch
          %218 = sbr.rel (%p216) target = $region20
        $region19: #{_lambda_.1} parent=11 // pred_region
          _
        $region20: #{_lambda_.1} parent=11 // pred_fallthru
          _
        // Predicated region
        $region21: #{_lambda_.1} parent=11 // pred_check
          %p219 = pneg %p170
        $region22: #{_lambda_.1} parent=11 // pred_check_branch
          %221 = sbr.rel (%p219) target = $region24
        $region23: #{_lambda_.1} parent=11 // pred_region
          _
        $region24: #{_lambda_.1} parent=11 // pred_fallthru
          _
      $region12: #{_lambda_.1} parent=5 // pred_fallthru
        _
      %p222 = scmp.lt.s32.totalorder %s15, 4
      // Predicated region
      $region25: #{_lambda_.1} parent=5 // pred_check
        %p223 = pneg %p222
      $region26: #{_lambda_.1} parent=5 // pred_check_branch
        %225 = sbr.rel (%p223) target = $region28
      $region27: #{_lambda_.1} parent=5 // pred_region
        // Predicated region
        $region29: #{_lambda_.1} parent=27 // pred_check
          %p226 = pneg %p49
        $region30: #{_lambda_.1} parent=27 // pred_check_branch
          %228 = sbr.rel (%p226) target = $region32
        $region31: #{_lambda_.1} parent=27 // pred_region
          %s229 = smul.u32 8, %s23
          %p230 = scmp.lt.s32.totalorder %s22, 1
          %s231 = scalar_select %p230, %s22, 1
          %p232 = scmp.lt.s32.totalorder %s229, 15
          %s233 = scalar_select %p232, %s229, 15
          %s234 = smul.addr %s231, 16
          %s235 = sadd.s32 %s233, %s234
          %s236 = smul.addr %s235, 8
          %s237 = scalar_lea.vmem %s0, %s236
          %s238 = smul.u32 8, %s23
        $region32: #{_lambda_.1} parent=27 // pred_fallthru
          _
        // Predicated region
        $region33: #{_lambda_.1} parent=27 // pred_check
          %p239 = pneg %p96
        $region34: #{_lambda_.1} parent=27 // pred_check_branch
          %241 = sbr.rel (%p239) target = $region36
        $region35: #{_lambda_.1} parent=27 // pred_region
          %p242 = scmp.lt.s32.totalorder %s22, 1
          %s243 = scalar_select %p242, %s22, 1
          %s244 = smul.addr %s243, 3
          %s245 = smul.addr %s244, 8
          %s246 = scalar_lea.vmem %s2, %s245
        $region36: #{_lambda_.1} parent=27 // pred_fallthru
          _
        // Predicated region
        $region37: #{_lambda_.1} parent=27 // pred_check
          %p247 = pneg %p122
        $region38: #{_lambda_.1} parent=27 // pred_check_branch
          %249 = sbr.rel (%p247) target = $region40
        $region39: #{_lambda_.1} parent=27 // pred_region
          %p250 = scmp.lt.s32.totalorder %s22, 1
          %s251 = scalar_select %p250, %s22, 1
          %s252 = smul.addr %s251, 8
          %s253 = scalar_lea.vmem %s3, %s252
        $region40: #{_lambda_.1} parent=27 // pred_fallthru
          _
      $region28: #{_lambda_.1} parent=5 // pred_fallthru
        _
      %p254 = scmp.le.s32.totalorder 1, %s15
      %p255 = scmp.lt.s32.totalorder %s15, 5
      %p256 = pnand %p254, %p255
      %p257 = pneg %p256
      // Predicated region
      $region41: #{_lambda_.1} parent=5 // pred_check
        _
      $region42: #{_lambda_.1} parent=5 // pred_check_branch
        %259 = sbr.rel (%p256) target = $region44
      $region43: #{_lambda_.1} parent=5 // pred_region
        %s260 = ssub.s32 %s15, 1
        %s261 = smul.u32 8, %s25
        %p262 = scmp.lt.s32.totalorder %s24, 1
        %s263 = scalar_select %p262, %s24, 1
        %p264 = scmp.lt.s32.totalorder %s261, 15
        %s265 = scalar_select %p264, %s261, 15
        %s266 = smul.addr %s263, 16
        %s267 = sadd.s32 %s265, %s266
        %s268 = smul.addr %s267, 8
        %s269 = scalar_lea.vmem %s0, %s268
        %p270 = pneg %p55
        %p271 = pneg %p52
        %p272 = pneg %p76
        %p273 = pneg %p73
        %p274 = scmp.lt.s32.totalorder %s24, 1
        %s275 = scalar_select %p274, %s24, 1
        %s276 = smul.addr %s275, 3
        %s277 = smul.addr %s276, 8
        %s278 = scalar_lea.vmem %s2, %s277
        %p279 = pneg %p102
        %p280 = pneg %p99
        %p281 = scmp.lt.s32.totalorder %s24, 1
        %s282 = scalar_select %p281, %s24, 1
        %s283 = smul.addr %s282, 8
        %s284 = scalar_lea.vmem %s3, %s283
        %p285 = pneg %p128
        %p286 = pneg %p125
        %p287 = pneg %p149
        %p288 = pneg %p146
        %p289 = pneg %p170
        %p290 = pneg %p167
        %p291 = pneg %p198
        %p292 = pneg %p195
        %s293 = sand.u32 %s185, 1
        %s294 = scalar_lea.sflag [#allocation3], %s293
        %s295 = sand.u32 %s185, 1
        %s296 = smul.addr %s295, 64
        %s297 = scalar_lea.vmem [#allocation2], %s296
        %s298 = smul.u32 8, %s25
        %p299 = scmp.lt.s32.totalorder %s24, 1
        %s300 = scalar_select %p299, %s24, 1
        %p301 = scmp.lt.s32.totalorder %s298, 15
        %s302 = scalar_select %p301, %s298, 15
        %s303 = smul.addr %s300, 16
        %s304 = sadd.s32 %s302, %s303
        %s305 = smul.addr %s304, 8
        %s306 = scalar_lea.vmem %s0, %s305
        %s307 = smul.u32 8, %s25
        %p308 = scmp.lt.s32.totalorder %s24, 1
        %s309 = scalar_select %p308, %s24, 1
        %s310 = smul.addr %s309, 3
        %s311 = smul.addr %s310, 8
        %s312 = scalar_lea.vmem %s2, %s311
        %p313 = scmp.lt.s32.totalorder %s24, 1
        %s314 = scalar_select %p313, %s24, 1
        %s315 = smul.addr %s314, 8
        %s316 = scalar_lea.vmem %s3, %s315
        %s317 = smul.u32 8, %s25
        %v318 = vld [vmem:[%s306] sm:$0xff]
        %v319 = vld [vmem:[%s306 + $0x8] sm:$0xff]
        %v320 = vld [vmem:[%s306 + $0x10] sm:$0xff]
        %v321 = vld [vmem:[%s306 + $0x18] sm:$0xff]
        %v322 = vld [vmem:[%s306 + $0x20] sm:$0xff]
        %v323 = vld [vmem:[%s306 + $0x28] sm:$0xff]
        %v324 = vld [vmem:[%s306 + $0x30] sm:$0xff]
        %v325 = vld [vmem:[%s306 + $0x38] sm:$0xff]
        %v326 = vld [vmem:[%s1] sm:$0xf]
        %v327 = vld [vmem:[%s312] sm:$0xff]
        %v328 = vld [vmem:[%s312 + $0x8] sm:$0xff]
        %v329 = vld [vmem:[%s312 + $0x10] sm:$0xff]
        %v330 = vld [vmem:[%s316] sm:$0xff]
        %v331 = vld [vmem:[%s4] sm:$0xff]
        %v332 = vld [vmem:[%s4 + $0x8] sm:$0xff]
        %v333 = vld [vmem:[%s4 + $0x10] sm:$0xff]
        %v334 = vld [vmem:[%s5] sm:$0xff]
        %vm335 = vcmask 64512
        %v337 = vsel %vm335, %v326, 0
        %339 = vmatprep.subr.mxu0 0.0
        %340 = vmatpush1.msra.mxu0 0.0
        %341 = vmatprep.subr.mxu0 0.0
        %342 = vmatpush1.msra.mxu0 0.0
        %343 = vmatprep.subr.mxu0 0.0
        %344 = vmatpush1.msra.mxu0 0.0
        %345 = vmatprep.subr.mxu0 0.0
        %346 = vmatpush1.msra.mxu0 0.0
        %347 = vmatprep.subr.mxu0 0.0
        %348 = vmatpush1.msra.mxu0 0.0
        %349 = vmatprep.subr.mxu0 0.0
        %350 = vmatpush1.msra.mxu0 0.0
        %351 = vmatprep.subr.mxu0 0.0
        %352 = vmatpush1.msra.mxu0 0.0
        %353 = vmatprep.subr.mxu0 0.0
        %354 = vmatpush1.msra.mxu0 0.0
        %355 = vmatprep.subr.mxu0 0.0
        %356 = vmatpush1.msra.mxu0 0.0
        %357 = vmatprep.subr.mxu0 0.0
        %358 = vmatpush1.msra.mxu0 0.0
        %359 = vmatprep.subr.mxu0 0.0
        %360 = vmatpush1.msra.mxu0 0.0
        %361 = vmatprep.subr.mxu0 0.0
        %362 = vmatpush1.msra.mxu0 0.0
        %363 = vmatprep.subr.mxu0 0.0
        %364 = vmatpush1.msra.mxu0 0.0
        %365 = vmatprep.subr.mxu0 0.0
        %366 = vmatpush1.msra.mxu0 0.0
        %367 = vmatprep.subr.mxu0 0.0
        %368 = vmatpush1.msra.mxu0 0.0
        %369 = vmatprep.subr.mxu0 %v319
        %370 = vmatpush1.msra.mxu0 %v318
        %371 = vmatprep.subr.mxu0 0.0
        %372 = vmatpush2.msra.mxu0 0.0
        %373 = vmatprep.subr.mxu0 0.0
        %374 = vmatpush2.msra.mxu0 0.0
        %375 = vmatprep.subr.mxu0 0.0
        %376 = vmatpush2.msra.mxu0 0.0
        %377 = vmatprep.subr.mxu0 0.0
        %378 = vmatpush2.msra.mxu0 0.0
        %379 = vmatprep.subr.mxu0 0.0
        %380 = vmatpush2.msra.mxu0 0.0
        %381 = vmatprep.subr.mxu0 0.0
        %382 = vmatpush2.msra.mxu0 0.0
        %383 = vmatprep.subr.mxu0 0.0
        %384 = vmatpush2.msra.mxu0 0.0
        %385 = vmatprep.subr.mxu0 0.0
        %386 = vmatpush2.msra.mxu0 0.0
        %387 = vmatprep.subr.mxu0 0.0
        %388 = vmatpush2.msra.mxu0 0.0
        %389 = vmatprep.subr.mxu0 0.0
        %390 = vmatpush2.msra.mxu0 0.0
        %391 = vmatprep.subr.mxu0 0.0
        %392 = vmatpush2.msra.mxu0 0.0
        %393 = vmatprep.subr.mxu0 0.0
        %394 = vmatpush2.msra.mxu0 0.0
        %395 = vmatprep.subr.mxu0 0.0
        %396 = vmatpush2.msra.mxu0 0.0
        %397 = vmatprep.subr.mxu0 0.0
        %398 = vmatpush2.msra.mxu0 0.0
        %399 = vmatprep.subr.mxu0 0.0
        %400 = vmatpush2.msra.mxu0 0.0
        %401 = vmatprep.subr.mxu0 0.0
        %402 = vmatpush2.msra.mxu0 0.0
        %403 = vmatprep.mubr.f32.mxu0 0.0
        %404 = vmatmul.mubr.f32.gmra.mxu0 %v337
        %v405 = vpop.f32.mrf.mxu0
        %v406 = vadd.f32 0.0, %v405
        %v407 = vpop.f32.mrf.mxu0
        %v408 = vadd.f32 0.0, %v407
        %409 = vdwg.mxu0
        %410 = vmatprep.subr.mxu0 0.0
        %411 = vmatpush1.msra.mxu0 0.0
        %412 = vmatprep.subr.mxu0 0.0
        %413 = vmatpush1.msra.mxu0 0.0
        %414 = vmatprep.subr.mxu0 0.0
        %415 = vmatpush1.msra.mxu0 0.0
        %416 = vmatprep.subr.mxu0 0.0
        %417 = vmatpush1.msra.mxu0 0.0
        %418 = vmatprep.subr.mxu0 0.0
        %419 = vmatpush1.msra.mxu0 0.0
        %420 = vmatprep.subr.mxu0 0.0
        %421 = vmatpush1.msra.mxu0 0.0
        %422 = vmatprep.subr.mxu0 0.0
        %423 = vmatpush1.msra.mxu0 0.0
        %424 = vmatprep.subr.mxu0 0.0
        %425 = vmatpush1.msra.mxu0 0.0
        %426 = vmatprep.subr.mxu0 0.0
        %427 = vmatpush1.msra.mxu0 0.0
        %428 = vmatprep.subr.mxu0 0.0
        %429 = vmatpush1.msra.mxu0 0.0
        %430 = vmatprep.subr.mxu0 0.0
        %431 = vmatpush1.msra.mxu0 0.0
        %432 = vmatprep.subr.mxu0 0.0
        %433 = vmatpush1.msra.mxu0 0.0
        %434 = vmatprep.subr.mxu0 0.0
        %435 = vmatpush1.msra.mxu0 0.0
        %436 = vmatprep.subr.mxu0 0.0
        %437 = vmatpush1.msra.mxu0 0.0
        %438 = vmatprep.subr.mxu0 0.0
        %439 = vmatpush1.msra.mxu0 0.0
        %440 = vmatprep.subr.mxu0 %v321
        %441 = vmatpush1.msra.mxu0 %v320
        %442 = vmatprep.subr.mxu0 0.0
        %443 = vmatpush2.msra.mxu0 0.0
        %444 = vmatprep.subr.mxu0 0.0
        %445 = vmatpush2.msra.mxu0 0.0
        %446 = vmatprep.subr.mxu0 0.0
        %447 = vmatpush2.msra.mxu0 0.0
        %448 = vmatprep.subr.mxu0 0.0
        %449 = vmatpush2.msra.mxu0 0.0
        %450 = vmatprep.subr.mxu0 0.0
        %451 = vmatpush2.msra.mxu0 0.0
        %452 = vmatprep.subr.mxu0 0.0
        %453 = vmatpush2.msra.mxu0 0.0
        %454 = vmatprep.subr.mxu0 0.0
        %455 = vmatpush2.msra.mxu0 0.0
        %456 = vmatprep.subr.mxu0 0.0
        %457 = vmatpush2.msra.mxu0 0.0
        %458 = vmatprep.subr.mxu0 0.0
        %459 = vmatpush2.msra.mxu0 0.0
        %460 = vmatprep.subr.mxu0 0.0
        %461 = vmatpush2.msra.mxu0 0.0
        %462 = vmatprep.subr.mxu0 0.0
        %463 = vmatpush2.msra.mxu0 0.0
        %464 = vmatprep.subr.mxu0 0.0
        %465 = vmatpush2.msra.mxu0 0.0
        %466 = vmatprep.subr.mxu0 0.0
        %467 = vmatpush2.msra.mxu0 0.0
        %468 = vmatprep.subr.mxu0 0.0
        %469 = vmatpush2.msra.mxu0 0.0
        %470 = vmatprep.subr.mxu0 0.0
        %471 = vmatpush2.msra.mxu0 0.0
        %472 = vmatprep.subr.mxu0 0.0
        %473 = vmatpush2.msra.mxu0 0.0
        %474 = vmatprep.mubr.f32.mxu0 0.0
        %475 = vmatmul.mubr.f32.gmra.mxu0 %v337
        %v476 = vpop.f32.mrf.mxu0
        %v477 = vadd.f32 0.0, %v476
        %v478 = vpop.f32.mrf.mxu0
        %v479 = vadd.f32 0.0, %v478
        %480 = vdwg.mxu0
        %481 = vmatprep.subr.mxu0 0.0
        %482 = vmatpush1.msra.mxu0 0.0
        %483 = vmatprep.subr.mxu0 0.0
        %484 = vmatpush1.msra.mxu0 0.0
        %485 = vmatprep.subr.mxu0 0.0
        %486 = vmatpush1.msra.mxu0 0.0
        %487 = vmatprep.subr.mxu0 0.0
        %488 = vmatpush1.msra.mxu0 0.0
        %489 = vmatprep.subr.mxu0 0.0
        %490 = vmatpush1.msra.mxu0 0.0
        %491 = vmatprep.subr.mxu0 0.0
        %492 = vmatpush1.msra.mxu0 0.0
        %493 = vmatprep.subr.mxu0 0.0
        %494 = vmatpush1.msra.mxu0 0.0
        %495 = vmatprep.subr.mxu0 0.0
        %496 = vmatpush1.msra.mxu0 0.0
        %497 = vmatprep.subr.mxu0 0.0
        %498 = vmatpush1.msra.mxu0 0.0
        %499 = vmatprep.subr.mxu0 0.0
        %500 = vmatpush1.msra.mxu0 0.0
        %501 = vmatprep.subr.mxu0 0.0
        %502 = vmatpush1.msra.mxu0 0.0
        %503 = vmatprep.subr.mxu0 0.0
        %504 = vmatpush1.msra.mxu0 0.0
        %505 = vmatprep.subr.mxu0 0.0
        %506 = vmatpush1.msra.mxu0 0.0
        %507 = vmatprep.subr.mxu0 0.0
        %508 = vmatpush1.msra.mxu0 0.0
        %509 = vmatprep.subr.mxu0 0.0
        %510 = vmatpush1.msra.mxu0 0.0
        %511 = vmatprep.subr.mxu0 %v323
        %512 = vmatpush1.msra.mxu0 %v322
        %513 = vmatprep.subr.mxu0 0.0
        %514 = vmatpush2.msra.mxu0 0.0
        %515 = vmatprep.subr.mxu0 0.0
        %516 = vmatpush2.msra.mxu0 0.0
        %517 = vmatprep.subr.mxu0 0.0
        %518 = vmatpush2.msra.mxu0 0.0
        %519 = vmatprep.subr.mxu0 0.0
        %520 = vmatpush2.msra.mxu0 0.0
        %521 = vmatprep.subr.mxu0 0.0
        %522 = vmatpush2.msra.mxu0 0.0
        %523 = vmatprep.subr.mxu0 0.0
        %524 = vmatpush2.msra.mxu0 0.0
        %525 = vmatprep.subr.mxu0 0.0
        %526 = vmatpush2.msra.mxu0 0.0
        %527 = vmatprep.subr.mxu0 0.0
        %528 = vmatpush2.msra.mxu0 0.0
        %529 = vmatprep.subr.mxu0 0.0
        %530 = vmatpush2.msra.mxu0 0.0
        %531 = vmatprep.subr.mxu0 0.0
        %532 = vmatpush2.msra.mxu0 0.0
        %533 = vmatprep.subr.mxu0 0.0
        %534 = vmatpush2.msra.mxu0 0.0
        %535 = vmatprep.subr.mxu0 0.0
        %536 = vmatpush2.msra.mxu0 0.0
        %537 = vmatprep.subr.mxu0 0.0
        %538 = vmatpush2.msra.mxu0 0.0
        %539 = vmatprep.subr.mxu0 0.0
        %540 = vmatpush2.msra.mxu0 0.0
        %541 = vmatprep.subr.mxu0 0.0
        %542 = vmatpush2.msra.mxu0 0.0
        %543 = vmatprep.subr.mxu0 0.0
        %544 = vmatpush2.msra.mxu0 0.0
        %545 = vmatprep.mubr.f32.mxu0 0.0
        %546 = vmatmul.mubr.f32.gmra.mxu0 %v337
        %v547 = vpop.f32.mrf.mxu0
        %v548 = vadd.f32 0.0, %v547
        %v549 = vpop.f32.mrf.mxu0
        %v550 = vadd.f32 0.0, %v549
        %551 = vdwg.mxu0
        %552 = vmatprep.subr.mxu0 0.0
        %553 = vmatpush1.msra.mxu0 0.0
        %554 = vmatprep.subr.mxu0 0.0
        %555 = vmatpush1.msra.mxu0 0.0
        %556 = vmatprep.subr.mxu0 0.0
        %557 = vmatpush1.msra.mxu0 0.0
        %558 = vmatprep.subr.mxu0 0.0
        %559 = vmatpush1.msra.mxu0 0.0
        %560 = vmatprep.subr.mxu0 0.0
        %561 = vmatpush1.msra.mxu0 0.0
        %562 = vmatprep.subr.mxu0 0.0
        %563 = vmatpush1.msra.mxu0 0.0
        %564 = vmatprep.subr.mxu0 0.0
        %565 = vmatpush1.msra.mxu0 0.0
        %566 = vmatprep.subr.mxu0 0.0
        %567 = vmatpush1.msra.mxu0 0.0
        %568 = vmatprep.subr.mxu0 0.0
        %569 = vmatpush1.msra.mxu0 0.0
        %570 = vmatprep.subr.mxu0 0.0
        %571 = vmatpush1.msra.mxu0 0.0
        %572 = vmatprep.subr.mxu0 0.0
        %573 = vmatpush1.msra.mxu0 0.0
        %574 = vmatprep.subr.mxu0 0.0
        %575 = vmatpush1.msra.mxu0 0.0
        %576 = vmatprep.subr.mxu0 0.0
        %577 = vmatpush1.msra.mxu0 0.0
        %578 = vmatprep.subr.mxu0 0.0
        %579 = vmatpush1.msra.mxu0 0.0
        %580 = vmatprep.subr.mxu0 0.0
        %581 = vmatpush1.msra.mxu0 0.0
        %582 = vmatprep.subr.mxu0 %v325
        %583 = vmatpush1.msra.mxu0 %v324
        %584 = vmatprep.subr.mxu0 0.0
        %585 = vmatpush2.msra.mxu0 0.0
        %586 = vmatprep.subr.mxu0 0.0
        %587 = vmatpush2.msra.mxu0 0.0
        %588 = vmatprep.subr.mxu0 0.0
        %589 = vmatpush2.msra.mxu0 0.0
        %590 = vmatprep.subr.mxu0 0.0
        %591 = vmatpush2.msra.mxu0 0.0
        %592 = vmatprep.subr.mxu0 0.0
        %593 = vmatpush2.msra.mxu0 0.0
        %594 = vmatprep.subr.mxu0 0.0
        %595 = vmatpush2.msra.mxu0 0.0
        %596 = vmatprep.subr.mxu0 0.0
        %597 = vmatpush2.msra.mxu0 0.0
        %598 = vmatprep.subr.mxu0 0.0
        %599 = vmatpush2.msra.mxu0 0.0
        %600 = vmatprep.subr.mxu0 0.0
        %601 = vmatpush2.msra.mxu0 0.0
        %602 = vmatprep.subr.mxu0 0.0
        %603 = vmatpush2.msra.mxu0 0.0
        %604 = vmatprep.subr.mxu0 0.0
        %605 = vmatpush2.msra.mxu0 0.0
        %606 = vmatprep.subr.mxu0 0.0
        %607 = vmatpush2.msra.mxu0 0.0
        %608 = vmatprep.subr.mxu0 0.0
        %609 = vmatpush2.msra.mxu0 0.0
        %610 = vmatprep.subr.mxu0 0.0
        %611 = vmatpush2.msra.mxu0 0.0
        %612 = vmatprep.subr.mxu0 0.0
        %613 = vmatpush2.msra.mxu0 0.0
        %614 = vmatprep.subr.mxu0 0.0
        %615 = vmatpush2.msra.mxu0 0.0
        %616 = vmatprep.mubr.f32.mxu0 0.0
        %617 = vmatmul.mubr.f32.gmra.mxu0 %v337
        %v618 = vpop.f32.mrf.mxu0
        %v619 = vadd.f32 0.0, %v618
        %v620 = vpop.f32.mrf.mxu0
        %v621 = vadd.f32 0.0, %v620
        %622 = vdwg.mxu0
        %624 = vset.pattern.permute.xlu0 0
        %625 = vperm.xlu0 %624, %v331
        %v626 = vpop.permute.xlu0 %625
        %629 = vset.pattern.permute.xlu0 0
        %630 = vperm.xlu0 %629, %v332
        %v631 = vpop.permute.xlu0 %630
        %634 = vset.pattern.permute.xlu0 0
        %635 = vperm.xlu0 %634, %v333
        %v636 = vpop.permute.xlu0 %635
        %vm638 = vcmask 31744
        %v640 = vsel %vm638, %v327, 0
        %v643 = vsel %vm638, %v328, 0
        %v646 = vsel %vm638, %v329, 0
        %vm648 = vcmask 1043456
        %v650 = vsel %vm648, %v406, 0
        %v653 = vsel %vm648, %v408, 0
        %v656 = vsel %vm648, %v477, 0
        %v659 = vsel %vm648, %v479, 0
        %v662 = vsel %vm648, %v548, 0
        %v665 = vsel %vm648, %v550, 0
        %v668 = vsel %vm648, %v619, 0
        %v671 = vsel %vm648, %v621, 0
        %673 = vmatprep.subr.mxu0 0.0
        %674 = vmatpush1.msra.mxu0 0.0
        %675 = vmatprep.subr.mxu0 0.0
        %676 = vmatpush1.msra.mxu0 0.0
        %677 = vmatprep.subr.mxu0 0.0
        %678 = vmatpush1.msra.mxu0 0.0
        %679 = vmatprep.subr.mxu0 0.0
        %680 = vmatpush1.msra.mxu0 0.0
        %681 = vmatprep.subr.mxu0 0.0
        %682 = vmatpush1.msra.mxu0 0.0
        %683 = vmatprep.subr.mxu0 0.0
        %684 = vmatpush1.msra.mxu0 0.0
        %685 = vmatprep.subr.mxu0 0.0
        %686 = vmatpush1.msra.mxu0 0.0
        %687 = vmatprep.subr.mxu0 0.0
        %688 = vmatpush1.msra.mxu0 0.0
        %689 = vmatprep.subr.mxu0 0.0
        %690 = vmatpush1.msra.mxu0 0.0
        %691 = vmatprep.subr.mxu0 0.0
        %692 = vmatpush1.msra.mxu0 0.0
        %693 = vmatprep.subr.mxu0 0.0
        %694 = vmatpush1.msra.mxu0 0.0
        %695 = vmatprep.subr.mxu0 0.0
        %696 = vmatpush1.msra.mxu0 0.0
        %697 = vmatprep.subr.mxu0 0.0
        %698 = vmatpush1.msra.mxu0 0.0
        %699 = vmatprep.subr.mxu0 0.0
        %700 = vmatpush1.msra.mxu0 0.0
        %701 = vmatprep.subr.mxu0 0.0
        %702 = vmatpush1.msra.mxu0 0.0
        %703 = vmatprep.subr.mxu0 %v653
        %704 = vmatpush1.msra.mxu0 %v650
        %705 = vmatprep.subr.mxu0 0.0
        %706 = vmatpush2.msra.mxu0 0.0
        %707 = vmatprep.subr.mxu0 0.0
        %708 = vmatpush2.msra.mxu0 0.0
        %709 = vmatprep.subr.mxu0 0.0
        %710 = vmatpush2.msra.mxu0 0.0
        %711 = vmatprep.subr.mxu0 0.0
        %712 = vmatpush2.msra.mxu0 0.0
        %713 = vmatprep.subr.mxu0 0.0
        %714 = vmatpush2.msra.mxu0 0.0
        %715 = vmatprep.subr.mxu0 0.0
        %716 = vmatpush2.msra.mxu0 0.0
        %717 = vmatprep.subr.mxu0 0.0
        %718 = vmatpush2.msra.mxu0 0.0
        %719 = vmatprep.subr.mxu0 0.0
        %720 = vmatpush2.msra.mxu0 0.0
        %721 = vmatprep.subr.mxu0 0.0
        %722 = vmatpush2.msra.mxu0 0.0
        %723 = vmatprep.subr.mxu0 0.0
        %724 = vmatpush2.msra.mxu0 0.0
        %725 = vmatprep.subr.mxu0 0.0
        %726 = vmatpush2.msra.mxu0 0.0
        %727 = vmatprep.subr.mxu0 0.0
        %728 = vmatpush2.msra.mxu0 0.0
        %729 = vmatprep.subr.mxu0 0.0
        %730 = vmatpush2.msra.mxu0 0.0
        %731 = vmatprep.subr.mxu0 0.0
        %732 = vmatpush2.msra.mxu0 0.0
        %733 = vmatprep.subr.mxu0 0.0
        %734 = vmatpush2.msra.mxu0 0.0
        %735 = vmatprep.subr.mxu0 0.0
        %736 = vmatpush2.msra.mxu0 0.0
        %737 = vmatprep.mubr.f32.mxu0 0.0
        %738 = vmatmul.mubr.f32.gmra.mxu0 %v640
        %v739 = vpop.f32.mrf.mxu0
        %v740 = vadd.f32 %v626, %v739
        %v741 = vpop.f32.mrf.mxu0
        %v742 = vadd.f32 %v626, %v741
        %743 = vmatprep.mubr.f32.mxu0 0.0
        %744 = vmatmul.mubr.f32.gmra.mxu0 %v643
        %v745 = vpop.f32.mrf.mxu0
        %v746 = vadd.f32 %v631, %v745
        %v747 = vpop.f32.mrf.mxu0
        %v748 = vadd.f32 %v631, %v747
        %749 = vmatprep.mubr.f32.mxu0 0.0
        %750 = vmatmul.mubr.f32.gmra.mxu0 %v646
        %v751 = vpop.f32.mrf.mxu0
        %v752 = vadd.f32 %v636, %v751
        %v753 = vpop.f32.mrf.mxu0
        %v754 = vadd.f32 %v636, %v753
        %755 = vdwg.mxu0
        %756 = vmatprep.subr.mxu0 0.0
        %757 = vmatpush1.msra.mxu0 0.0
        %758 = vmatprep.subr.mxu0 0.0
        %759 = vmatpush1.msra.mxu0 0.0
        %760 = vmatprep.subr.mxu0 0.0
        %761 = vmatpush1.msra.mxu0 0.0
        %762 = vmatprep.subr.mxu0 0.0
        %763 = vmatpush1.msra.mxu0 0.0
        %764 = vmatprep.subr.mxu0 0.0
        %765 = vmatpush1.msra.mxu0 0.0
        %766 = vmatprep.subr.mxu0 0.0
        %767 = vmatpush1.msra.mxu0 0.0
        %768 = vmatprep.subr.mxu0 0.0
        %769 = vmatpush1.msra.mxu0 0.0
        %770 = vmatprep.subr.mxu0 0.0
        %771 = vmatpush1.msra.mxu0 0.0
        %772 = vmatprep.subr.mxu0 0.0
        %773 = vmatpush1.msra.mxu0 0.0
        %774 = vmatprep.subr.mxu0 0.0
        %775 = vmatpush1.msra.mxu0 0.0
        %776 = vmatprep.subr.mxu0 0.0
        %777 = vmatpush1.msra.mxu0 0.0
        %778 = vmatprep.subr.mxu0 0.0
        %779 = vmatpush1.msra.mxu0 0.0
        %780 = vmatprep.subr.mxu0 0.0
        %781 = vmatpush1.msra.mxu0 0.0
        %782 = vmatprep.subr.mxu0 0.0
        %783 = vmatpush1.msra.mxu0 0.0
        %784 = vmatprep.subr.mxu0 0.0
        %785 = vmatpush1.msra.mxu0 0.0
        %786 = vmatprep.subr.mxu0 %v659
        %787 = vmatpush1.msra.mxu0 %v656
        %788 = vmatprep.subr.mxu0 0.0
        %789 = vmatpush2.msra.mxu0 0.0
        %790 = vmatprep.subr.mxu0 0.0
        %791 = vmatpush2.msra.mxu0 0.0
        %792 = vmatprep.subr.mxu0 0.0
        %793 = vmatpush2.msra.mxu0 0.0
        %794 = vmatprep.subr.mxu0 0.0
        %795 = vmatpush2.msra.mxu0 0.0
        %796 = vmatprep.subr.mxu0 0.0
        %797 = vmatpush2.msra.mxu0 0.0
        %798 = vmatprep.subr.mxu0 0.0
        %799 = vmatpush2.msra.mxu0 0.0
        %800 = vmatprep.subr.mxu0 0.0
        %801 = vmatpush2.msra.mxu0 0.0
        %802 = vmatprep.subr.mxu0 0.0
        %803 = vmatpush2.msra.mxu0 0.0
        %804 = vmatprep.subr.mxu0 0.0
        %805 = vmatpush2.msra.mxu0 0.0
        %806 = vmatprep.subr.mxu0 0.0
        %807 = vmatpush2.msra.mxu0 0.0
        %808 = vmatprep.subr.mxu0 0.0
        %809 = vmatpush2.msra.mxu0 0.0
        %810 = vmatprep.subr.mxu0 0.0
        %811 = vmatpush2.msra.mxu0 0.0
        %812 = vmatprep.subr.mxu0 0.0
        %813 = vmatpush2.msra.mxu0 0.0
        %814 = vmatprep.subr.mxu0 0.0
        %815 = vmatpush2.msra.mxu0 0.0
        %816 = vmatprep.subr.mxu0 0.0
        %817 = vmatpush2.msra.mxu0 0.0
        %818 = vmatprep.subr.mxu0 0.0
        %819 = vmatpush2.msra.mxu0 0.0
        %820 = vmatprep.mubr.f32.mxu0 0.0
        %821 = vmatmul.mubr.f32.gmra.mxu0 %v640
        %v822 = vpop.f32.mrf.mxu0
        %v823 = vadd.f32 %v626, %v822
        %v824 = vpop.f32.mrf.mxu0
        %v825 = vadd.f32 %v626, %v824
        %826 = vmatprep.mubr.f32.mxu0 0.0
        %827 = vmatmul.mubr.f32.gmra.mxu0 %v643
        %v828 = vpop.f32.mrf.mxu0
        %v829 = vadd.f32 %v631, %v828
        %v830 = vpop.f32.mrf.mxu0
        %v831 = vadd.f32 %v631, %v830
        %832 = vmatprep.mubr.f32.mxu0 0.0
        %833 = vmatmul.mubr.f32.gmra.mxu0 %v646
        %v834 = vpop.f32.mrf.mxu0
        %v835 = vadd.f32 %v636, %v834
        %v836 = vpop.f32.mrf.mxu0
        %v837 = vadd.f32 %v636, %v836
        %838 = vdwg.mxu0
        %839 = vmatprep.subr.mxu0 0.0
        %840 = vmatpush1.msra.mxu0 0.0
        %841 = vmatprep.subr.mxu0 0.0
        %842 = vmatpush1.msra.mxu0 0.0
        %843 = vmatprep.subr.mxu0 0.0
        %844 = vmatpush1.msra.mxu0 0.0
        %845 = vmatprep.subr.mxu0 0.0
        %846 = vmatpush1.msra.mxu0 0.0
        %847 = vmatprep.subr.mxu0 0.0
        %848 = vmatpush1.msra.mxu0 0.0
        %849 = vmatprep.subr.mxu0 0.0
        %850 = vmatpush1.msra.mxu0 0.0
        %851 = vmatprep.subr.mxu0 0.0
        %852 = vmatpush1.msra.mxu0 0.0
        %853 = vmatprep.subr.mxu0 0.0
        %854 = vmatpush1.msra.mxu0 0.0
        %855 = vmatprep.subr.mxu0 0.0
        %856 = vmatpush1.msra.mxu0 0.0
        %857 = vmatprep.subr.mxu0 0.0
        %858 = vmatpush1.msra.mxu0 0.0
        %859 = vmatprep.subr.mxu0 0.0
        %860 = vmatpush1.msra.mxu0 0.0
        %861 = vmatprep.subr.mxu0 0.0
        %862 = vmatpush1.msra.mxu0 0.0
        %863 = vmatprep.subr.mxu0 0.0
        %864 = vmatpush1.msra.mxu0 0.0
        %865 = vmatprep.subr.mxu0 0.0
        %866 = vmatpush1.msra.mxu0 0.0
        %867 = vmatprep.subr.mxu0 0.0
        %868 = vmatpush1.msra.mxu0 0.0
        %869 = vmatprep.subr.mxu0 %v665
        %870 = vmatpush1.msra.mxu0 %v662
        %871 = vmatprep.subr.mxu0 0.0
        %872 = vmatpush2.msra.mxu0 0.0
        %873 = vmatprep.subr.mxu0 0.0
        %874 = vmatpush2.msra.mxu0 0.0
        %875 = vmatprep.subr.mxu0 0.0
        %876 = vmatpush2.msra.mxu0 0.0
        %877 = vmatprep.subr.mxu0 0.0
        %878 = vmatpush2.msra.mxu0 0.0
        %879 = vmatprep.subr.mxu0 0.0
        %880 = vmatpush2.msra.mxu0 0.0
        %881 = vmatprep.subr.mxu0 0.0
        %882 = vmatpush2.msra.mxu0 0.0
        %883 = vmatprep.subr.mxu0 0.0
        %884 = vmatpush2.msra.mxu0 0.0
        %885 = vmatprep.subr.mxu0 0.0
        %886 = vmatpush2.msra.mxu0 0.0
        %887 = vmatprep.subr.mxu0 0.0
        %888 = vmatpush2.msra.mxu0 0.0
        %889 = vmatprep.subr.mxu0 0.0
        %890 = vmatpush2.msra.mxu0 0.0
        %891 = vmatprep.subr.mxu0 0.0
        %892 = vmatpush2.msra.mxu0 0.0
        %893 = vmatprep.subr.mxu0 0.0
        %894 = vmatpush2.msra.mxu0 0.0
        %895 = vmatprep.subr.mxu0 0.0
        %896 = vmatpush2.msra.mxu0 0.0
        %897 = vmatprep.subr.mxu0 0.0
        %898 = vmatpush2.msra.mxu0 0.0
        %899 = vmatprep.subr.mxu0 0.0
        %900 = vmatpush2.msra.mxu0 0.0
        %901 = vmatprep.subr.mxu0 0.0
        %902 = vmatpush2.msra.mxu0 0.0
        %903 = vmatprep.mubr.f32.mxu0 0.0
        %904 = vmatmul.mubr.f32.gmra.mxu0 %v640
        %v905 = vpop.f32.mrf.mxu0
        %v906 = vadd.f32 %v626, %v905
        %v907 = vpop.f32.mrf.mxu0
        %v908 = vadd.f32 %v626, %v907
        %909 = vmatprep.mubr.f32.mxu0 0.0
        %910 = vmatmul.mubr.f32.gmra.mxu0 %v643
        %v911 = vpop.f32.mrf.mxu0
        %v912 = vadd.f32 %v631, %v911
        %v913 = vpop.f32.mrf.mxu0
        %v914 = vadd.f32 %v631, %v913
        %915 = vmatprep.mubr.f32.mxu0 0.0
        %916 = vmatmul.mubr.f32.gmra.mxu0 %v646
        %v917 = vpop.f32.mrf.mxu0
        %v918 = vadd.f32 %v636, %v917
        %v919 = vpop.f32.mrf.mxu0
        %v920 = vadd.f32 %v636, %v919
        %921 = vdwg.mxu0
        %922 = vmatprep.subr.mxu0 0.0
        %923 = vmatpush1.msra.mxu0 0.0
        %924 = vmatprep.subr.mxu0 0.0
        %925 = vmatpush1.msra.mxu0 0.0
        %926 = vmatprep.subr.mxu0 0.0
        %927 = vmatpush1.msra.mxu0 0.0
        %928 = vmatprep.subr.mxu0 0.0
        %929 = vmatpush1.msra.mxu0 0.0
        %930 = vmatprep.subr.mxu0 0.0
        %931 = vmatpush1.msra.mxu0 0.0
        %932 = vmatprep.subr.mxu0 0.0
        %933 = vmatpush1.msra.mxu0 0.0
        %934 = vmatprep.subr.mxu0 0.0
        %935 = vmatpush1.msra.mxu0 0.0
        %936 = vmatprep.subr.mxu0 0.0
        %937 = vmatpush1.msra.mxu0 0.0
        %938 = vmatprep.subr.mxu0 0.0
        %939 = vmatpush1.msra.mxu0 0.0
        %940 = vmatprep.subr.mxu0 0.0
        %941 = vmatpush1.msra.mxu0 0.0
        %942 = vmatprep.subr.mxu0 0.0
        %943 = vmatpush1.msra.mxu0 0.0
        %944 = vmatprep.subr.mxu0 0.0
        %945 = vmatpush1.msra.mxu0 0.0
        %946 = vmatprep.subr.mxu0 0.0
        %947 = vmatpush1.msra.mxu0 0.0
        %948 = vmatprep.subr.mxu0 0.0
        %949 = vmatpush1.msra.mxu0 0.0
        %950 = vmatprep.subr.mxu0 0.0
        %951 = vmatpush1.msra.mxu0 0.0
        %952 = vmatprep.subr.mxu0 %v671
        %953 = vmatpush1.msra.mxu0 %v668
        %954 = vmatprep.subr.mxu0 0.0
        %955 = vmatpush2.msra.mxu0 0.0
        %956 = vmatprep.subr.mxu0 0.0
        %957 = vmatpush2.msra.mxu0 0.0
        %958 = vmatprep.subr.mxu0 0.0
        %959 = vmatpush2.msra.mxu0 0.0
        %960 = vmatprep.subr.mxu0 0.0
        %961 = vmatpush2.msra.mxu0 0.0
        %962 = vmatprep.subr.mxu0 0.0
        %963 = vmatpush2.msra.mxu0 0.0
        %964 = vmatprep.subr.mxu0 0.0
        %965 = vmatpush2.msra.mxu0 0.0
        %966 = vmatprep.subr.mxu0 0.0
        %967 = vmatpush2.msra.mxu0 0.0
        %968 = vmatprep.subr.mxu0 0.0
        %969 = vmatpush2.msra.mxu0 0.0
        %970 = vmatprep.subr.mxu0 0.0
        %971 = vmatpush2.msra.mxu0 0.0
        %972 = vmatprep.subr.mxu0 0.0
        %973 = vmatpush2.msra.mxu0 0.0
        %974 = vmatprep.subr.mxu0 0.0
        %975 = vmatpush2.msra.mxu0 0.0
        %976 = vmatprep.subr.mxu0 0.0
        %977 = vmatpush2.msra.mxu0 0.0
        %978 = vmatprep.subr.mxu0 0.0
        %979 = vmatpush2.msra.mxu0 0.0
        %980 = vmatprep.subr.mxu0 0.0
        %981 = vmatpush2.msra.mxu0 0.0
        %982 = vmatprep.subr.mxu0 0.0
        %983 = vmatpush2.msra.mxu0 0.0
        %984 = vmatprep.subr.mxu0 0.0
        %985 = vmatpush2.msra.mxu0 0.0
        %986 = vmatprep.mubr.f32.mxu0 0.0
        %987 = vmatmul.mubr.f32.gmra.mxu0 %v640
        %v988 = vpop.f32.mrf.mxu0
        %v989 = vadd.f32 %v626, %v988
        %v990 = vpop.f32.mrf.mxu0
        %v991 = vadd.f32 %v626, %v990
        %992 = vmatprep.mubr.f32.mxu0 0.0
        %993 = vmatmul.mubr.f32.gmra.mxu0 %v643
        %v994 = vpop.f32.mrf.mxu0
        %v995 = vadd.f32 %v631, %v994
        %v996 = vpop.f32.mrf.mxu0
        %v997 = vadd.f32 %v631, %v996
        %998 = vmatprep.mubr.f32.mxu0 0.0
        %999 = vmatmul.mubr.f32.gmra.mxu0 %v646
        %v1000 = vpop.f32.mrf.mxu0
        %v1001 = vadd.f32 %v636, %v1000
        %v1002 = vpop.f32.mrf.mxu0
        %v1003 = vadd.f32 %v636, %v1002
        %1004 = vdwg.mxu0
        %v1005 = vmax.f32 %v740, %v746
        %v1006 = vrot.slane %v1005, 4
        %v1007 = vmax.f32 %v1005, %v1006
        %v1008 = vrot.slane %v1007, 2
        %v1009 = vmax.f32 %v1007, %v1008
        %v1010 = vrot.slane %v1009, 1
        %v1011 = vmax.f32 %v1009, %v1010
        %v1012 = vmax.f32 %v742, %v748
        %v1013 = vrot.slane %v1012, 4
        %v1014 = vmax.f32 %v1012, %v1013
        %v1015 = vrot.slane %v1014, 2
        %v1016 = vmax.f32 %v1014, %v1015
        %v1017 = vrot.slane %v1016, 1
        %v1018 = vmax.f32 %v1016, %v1017
        %v1019 = vmax.f32 %v823, %v829
        %v1020 = vrot.slane %v1019, 4
        %v1021 = vmax.f32 %v1019, %v1020
        %v1022 = vrot.slane %v1021, 2
        %v1023 = vmax.f32 %v1021, %v1022
        %v1024 = vrot.slane %v1023, 1
        %v1025 = vmax.f32 %v1023, %v1024
        %v1026 = vmax.f32 %v825, %v831
        %v1027 = vrot.slane %v1026, 4
        %v1028 = vmax.f32 %v1026, %v1027
        %v1029 = vrot.slane %v1028, 2
        %v1030 = vmax.f32 %v1028, %v1029
        %v1031 = vrot.slane %v1030, 1
        %v1032 = vmax.f32 %v1030, %v1031
        %v1033 = vmax.f32 %v906, %v912
        %v1034 = vrot.slane %v1033, 4
        %v1035 = vmax.f32 %v1033, %v1034
        %v1036 = vrot.slane %v1035, 2
        %v1037 = vmax.f32 %v1035, %v1036
        %v1038 = vrot.slane %v1037, 1
        %v1039 = vmax.f32 %v1037, %v1038
        %v1040 = vmax.f32 %v908, %v914
        %v1041 = vrot.slane %v1040, 4
        %v1042 = vmax.f32 %v1040, %v1041
        %v1043 = vrot.slane %v1042, 2
        %v1044 = vmax.f32 %v1042, %v1043
        %v1045 = vrot.slane %v1044, 1
        %v1046 = vmax.f32 %v1044, %v1045
        %v1047 = vmax.f32 %v989, %v995
        %v1048 = vrot.slane %v1047, 4
        %v1049 = vmax.f32 %v1047, %v1048
        %v1050 = vrot.slane %v1049, 2
        %v1051 = vmax.f32 %v1049, %v1050
        %v1052 = vrot.slane %v1051, 1
        %v1053 = vmax.f32 %v1051, %v1052
        %v1054 = vmax.f32 %v991, %v997
        %v1055 = vrot.slane %v1054, 4
        %v1056 = vmax.f32 %v1054, %v1055
        %v1057 = vrot.slane %v1056, 2
        %v1058 = vmax.f32 %v1056, %v1057
        %v1059 = vrot.slane %v1058, 1
        %v1060 = vmax.f32 %v1058, %v1059
        %v1061 = vsub.f32 %v740, %v1011
        %v1062 = vsub.f32 %v742, %v1018
        %v1063 = vsub.f32 %v823, %v1025
        %v1064 = vsub.f32 %v825, %v1032
        %v1065 = vsub.f32 %v906, %v1039
        %v1066 = vsub.f32 %v908, %v1046
        %v1067 = vsub.f32 %v989, %v1053
        %v1068 = vsub.f32 %v991, %v1060
        %v1069 = vsub.f32 %v746, %v1011
        %v1070 = vsub.f32 %v748, %v1018
        %v1071 = vsub.f32 %v829, %v1025
        %v1072 = vsub.f32 %v831, %v1032
        %v1073 = vsub.f32 %v912, %v1039
        %v1074 = vsub.f32 %v914, %v1046
        %v1075 = vsub.f32 %v995, %v1053
        %v1076 = vsub.f32 %v997, %v1060
        %v1077 = vmul.f32 %v1061, 1.442695
        %v1078 = vpow.pop %v1077
        %v1079 = vmul.f32 %v1062, 1.442695
        %v1080 = vpow.pop %v1079
        %v1081 = vmul.f32 %v1063, 1.442695
        %v1082 = vpow.pop %v1081
        %v1083 = vmul.f32 %v1064, 1.442695
        %v1084 = vpow.pop %v1083
        %v1085 = vmul.f32 %v1065, 1.442695
        %v1086 = vpow.pop %v1085
        %v1087 = vmul.f32 %v1066, 1.442695
        %v1088 = vpow.pop %v1087
        %v1089 = vmul.f32 %v1067, 1.442695
        %v1090 = vpow.pop %v1089
        %v1091 = vmul.f32 %v1068, 1.442695
        %v1092 = vpow.pop %v1091
        %v1093 = vmul.f32 %v1069, 1.442695
        %v1094 = vpow.pop %v1093
        %v1095 = vmul.f32 %v1070, 1.442695
        %v1096 = vpow.pop %v1095
        %v1097 = vmul.f32 %v1071, 1.442695
        %v1098 = vpow.pop %v1097
        %v1099 = vmul.f32 %v1072, 1.442695
        %v1100 = vpow.pop %v1099
        %v1101 = vmul.f32 %v1073, 1.442695
        %v1102 = vpow.pop %v1101
        %v1103 = vmul.f32 %v1074, 1.442695
        %v1104 = vpow.pop %v1103
        %v1105 = vmul.f32 %v1075, 1.442695
        %v1106 = vpow.pop %v1105
        %v1107 = vmul.f32 %v1076, 1.442695
        %v1108 = vpow.pop %v1107
        %v1109 = vadd.f32 %v1078, %v1094
        %v1110 = vrot.slane %v1109, 4
        %v1111 = vadd.f32 %v1109, %v1110
        %v1112 = vrot.slane %v1111, 2
        %v1113 = vadd.f32 %v1111, %v1112
        %v1114 = vrot.slane %v1113, 1
        %v1115 = vadd.f32 %v1113, %v1114
        %v1116 = vadd.f32 %v1080, %v1096
        %v1117 = vrot.slane %v1116, 4
        %v1118 = vadd.f32 %v1116, %v1117
        %v1119 = vrot.slane %v1118, 2
        %v1120 = vadd.f32 %v1118, %v1119
        %v1121 = vrot.slane %v1120, 1
        %v1122 = vadd.f32 %v1120, %v1121
        %v1123 = vadd.f32 %v1082, %v1098
        %v1124 = vrot.slane %v1123, 4
        %v1125 = vadd.f32 %v1123, %v1124
        %v1126 = vrot.slane %v1125, 2
        %v1127 = vadd.f32 %v1125, %v1126
        %v1128 = vrot.slane %v1127, 1
        %v1129 = vadd.f32 %v1127, %v1128
        %v1130 = vadd.f32 %v1084, %v1100
        %v1131 = vrot.slane %v1130, 4
        %v1132 = vadd.f32 %v1130, %v1131
        %v1133 = vrot.slane %v1132, 2
        %v1134 = vadd.f32 %v1132, %v1133
        %v1135 = vrot.slane %v1134, 1
        %v1136 = vadd.f32 %v1134, %v1135
        %v1137 = vadd.f32 %v1086, %v1102
        %v1138 = vrot.slane %v1137, 4
        %v1139 = vadd.f32 %v1137, %v1138
        %v1140 = vrot.slane %v1139, 2
        %v1141 = vadd.f32 %v1139, %v1140
        %v1142 = vrot.slane %v1141, 1
        %v1143 = vadd.f32 %v1141, %v1142
        %v1144 = vadd.f32 %v1088, %v1104
        %v1145 = vrot.slane %v1144, 4
        %v1146 = vadd.f32 %v1144, %v1145
        %v1147 = vrot.slane %v1146, 2
        %v1148 = vadd.f32 %v1146, %v1147
        %v1149 = vrot.slane %v1148, 1
        %v1150 = vadd.f32 %v1148, %v1149
        %v1151 = vadd.f32 %v1090, %v1106
        %v1152 = vrot.slane %v1151, 4
        %v1153 = vadd.f32 %v1151, %v1152
        %v1154 = vrot.slane %v1153, 2
        %v1155 = vadd.f32 %v1153, %v1154
        %v1156 = vrot.slane %v1155, 1
        %v1157 = vadd.f32 %v1155, %v1156
        %v1158 = vadd.f32 %v1092, %v1108
        %v1159 = vrot.slane %v1158, 4
        %v1160 = vadd.f32 %v1158, %v1159
        %v1161 = vrot.slane %v1160, 2
        %v1162 = vadd.f32 %v1160, %v1161
        %v1163 = vrot.slane %v1162, 1
        %v1164 = vadd.f32 %v1162, %v1163
        %v1165 = vrcp.pop %v1115
        %v1166 = vrcp.pop %v1122
        %v1167 = vrcp.pop %v1129
        %v1168 = vrcp.pop %v1136
        %v1169 = vrcp.pop %v1143
        %v1170 = vrcp.pop %v1150
        %v1171 = vrcp.pop %v1157
        %v1172 = vrcp.pop %v1164
        %v1173 = vmul.f32 %v1078, %v1165
        %v1174 = vmul.f32 %v1080, %v1166
        %v1175 = vmul.f32 %v1082, %v1167
        %v1176 = vmul.f32 %v1084, %v1168
        %v1177 = vmul.f32 %v1086, %v1169
        %v1178 = vmul.f32 %v1088, %v1170
        %v1179 = vmul.f32 %v1090, %v1171
        %v1180 = vmul.f32 %v1092, %v1172
        %v1181 = vmul.f32 %v1094, %v1165
        %v1182 = vmul.f32 %v1096, %v1166
        %v1183 = vmul.f32 %v1098, %v1167
        %v1184 = vmul.f32 %v1100, %v1168
        %v1185 = vmul.f32 %v1102, %v1169
        %v1186 = vmul.f32 %v1104, %v1170
        %v1187 = vmul.f32 %v1106, %v1171
        %v1188 = vmul.f32 %v1108, %v1172
        %v1189 = vrot.slane %v752, 4
        %v1190 = vmax.f32 %v752, %v1189
        %v1191 = vrot.slane %v1190, 2
        %v1192 = vmax.f32 %v1190, %v1191
        %v1193 = vrot.slane %v1192, 1
        %v1194 = vmax.f32 %v1192, %v1193
        %v1195 = vrot.slane %v754, 4
        %v1196 = vmax.f32 %v754, %v1195
        %v1197 = vrot.slane %v1196, 2
        %v1198 = vmax.f32 %v1196, %v1197
        %v1199 = vrot.slane %v1198, 1
        %v1200 = vmax.f32 %v1198, %v1199
        %v1201 = vrot.slane %v835, 4
        %v1202 = vmax.f32 %v835, %v1201
        %v1203 = vrot.slane %v1202, 2
        %v1204 = vmax.f32 %v1202, %v1203
        %v1205 = vrot.slane %v1204, 1
        %v1206 = vmax.f32 %v1204, %v1205
        %v1207 = vrot.slane %v837, 4
        %v1208 = vmax.f32 %v837, %v1207
        %v1209 = vrot.slane %v1208, 2
        %v1210 = vmax.f32 %v1208, %v1209
        %v1211 = vrot.slane %v1210, 1
        %v1212 = vmax.f32 %v1210, %v1211
        %v1213 = vrot.slane %v918, 4
        %v1214 = vmax.f32 %v918, %v1213
        %v1215 = vrot.slane %v1214, 2
        %v1216 = vmax.f32 %v1214, %v1215
        %v1217 = vrot.slane %v1216, 1
        %v1218 = vmax.f32 %v1216, %v1217
        %v1219 = vrot.slane %v920, 4
        %v1220 = vmax.f32 %v920, %v1219
        %v1221 = vrot.slane %v1220, 2
        %v1222 = vmax.f32 %v1220, %v1221
        %v1223 = vrot.slane %v1222, 1
        %v1224 = vmax.f32 %v1222, %v1223
        %v1225 = vrot.slane %v1001, 4
        %v1226 = vmax.f32 %v1001, %v1225
        %v1227 = vrot.slane %v1226, 2
        %v1228 = vmax.f32 %v1226, %v1227
        %v1229 = vrot.slane %v1228, 1
        %v1230 = vmax.f32 %v1228, %v1229
        %v1231 = vrot.slane %v1003, 4
        %v1232 = vmax.f32 %v1003, %v1231
        %v1233 = vrot.slane %v1232, 2
        %v1234 = vmax.f32 %v1232, %v1233
        %v1235 = vrot.slane %v1234, 1
        %v1236 = vmax.f32 %v1234, %v1235
        %v1237 = vsub.f32 %v752, %v1194
        %v1238 = vsub.f32 %v754, %v1200
        %v1239 = vsub.f32 %v835, %v1206
        %v1240 = vsub.f32 %v837, %v1212
        %v1241 = vsub.f32 %v918, %v1218
        %v1242 = vsub.f32 %v920, %v1224
        %v1243 = vsub.f32 %v1001, %v1230
        %v1244 = vsub.f32 %v1003, %v1236
        %v1245 = vmul.f32 %v1237, 1.442695
        %v1246 = vpow.pop %v1245
        %v1247 = vmul.f32 %v1238, 1.442695
        %v1248 = vpow.pop %v1247
        %v1249 = vmul.f32 %v1239, 1.442695
        %v1250 = vpow.pop %v1249
        %v1251 = vmul.f32 %v1240, 1.442695
        %v1252 = vpow.pop %v1251
        %v1253 = vmul.f32 %v1241, 1.442695
        %v1254 = vpow.pop %v1253
        %v1255 = vmul.f32 %v1242, 1.442695
        %v1256 = vpow.pop %v1255
        %v1257 = vmul.f32 %v1243, 1.442695
        %v1258 = vpow.pop %v1257
        %v1259 = vmul.f32 %v1244, 1.442695
        %v1260 = vpow.pop %v1259
        %v1261 = vrot.slane %v1246, 4
        %v1262 = vadd.f32 %v1246, %v1261
        %v1263 = vrot.slane %v1262, 2
        %v1264 = vadd.f32 %v1262, %v1263
        %v1265 = vrot.slane %v1264, 1
        %v1266 = vadd.f32 %v1264, %v1265
        %v1267 = vrot.slane %v1248, 4
        %v1268 = vadd.f32 %v1248, %v1267
        %v1269 = vrot.slane %v1268, 2
        %v1270 = vadd.f32 %v1268, %v1269
        %v1271 = vrot.slane %v1270, 1
        %v1272 = vadd.f32 %v1270, %v1271
        %v1273 = vrot.slane %v1250, 4
        %v1274 = vadd.f32 %v1250, %v1273
        %v1275 = vrot.slane %v1274, 2
        %v1276 = vadd.f32 %v1274, %v1275
        %v1277 = vrot.slane %v1276, 1
        %v1278 = vadd.f32 %v1276, %v1277
        %v1279 = vrot.slane %v1252, 4
        %v1280 = vadd.f32 %v1252, %v1279
        %v1281 = vrot.slane %v1280, 2
        %v1282 = vadd.f32 %v1280, %v1281
        %v1283 = vrot.slane %v1282, 1
        %v1284 = vadd.f32 %v1282, %v1283
        %v1285 = vrot.slane %v1254, 4
        %v1286 = vadd.f32 %v1254, %v1285
        %v1287 = vrot.slane %v1286, 2
        %v1288 = vadd.f32 %v1286, %v1287
        %v1289 = vrot.slane %v1288, 1
        %v1290 = vadd.f32 %v1288, %v1289
        %v1291 = vrot.slane %v1256, 4
        %v1292 = vadd.f32 %v1256, %v1291
        %v1293 = vrot.slane %v1292, 2
        %v1294 = vadd.f32 %v1292, %v1293
        %v1295 = vrot.slane %v1294, 1
        %v1296 = vadd.f32 %v1294, %v1295
        %v1297 = vrot.slane %v1258, 4
        %v1298 = vadd.f32 %v1258, %v1297
        %v1299 = vrot.slane %v1298, 2
        %v1300 = vadd.f32 %v1298, %v1299
        %v1301 = vrot.slane %v1300, 1
        %v1302 = vadd.f32 %v1300, %v1301
        %v1303 = vrot.slane %v1260, 4
        %v1304 = vadd.f32 %v1260, %v1303
        %v1305 = vrot.slane %v1304, 2
        %v1306 = vadd.f32 %v1304, %v1305
        %v1307 = vrot.slane %v1306, 1
        %v1308 = vadd.f32 %v1306, %v1307
        %v1309 = vrcp.pop %v1266
        %v1310 = vrcp.pop %v1272
        %v1311 = vrcp.pop %v1278
        %v1312 = vrcp.pop %v1284
        %v1313 = vrcp.pop %v1290
        %v1314 = vrcp.pop %v1296
        %v1315 = vrcp.pop %v1302
        %v1316 = vrcp.pop %v1308
        %v1317 = vmul.f32 %v1246, %v1309
        %v1318 = vmul.f32 %v1248, %v1310
        %v1319 = vmul.f32 %v1250, %v1311
        %v1320 = vmul.f32 %v1252, %v1312
        %v1321 = vmul.f32 %v1254, %v1313
        %v1322 = vmul.f32 %v1256, %v1314
        %v1323 = vmul.f32 %v1258, %v1315
        %v1324 = vmul.f32 %v1260, %v1316
        %vm1325 = vcmask 195584
        %v1327 = vsel %vm1325, %v330, 0
        %1329 = vmatprep.subr.mxu0 0.0
        %1330 = vmatpush1.msra.mxu0 0.0
        %1331 = vmatprep.subr.mxu0 0.0
        %1332 = vmatpush1.msra.mxu0 0.0
        %1333 = vmatprep.subr.mxu0 0.0
        %1334 = vmatpush1.msra.mxu0 0.0
        %1335 = vmatprep.subr.mxu0 0.0
        %1336 = vmatpush1.msra.mxu0 0.0
        %1337 = vmatprep.subr.mxu0 0.0
        %1338 = vmatpush1.msra.mxu0 0.0
        %1339 = vmatprep.subr.mxu0 0.0
        %1340 = vmatpush1.msra.mxu0 0.0
        %1341 = vmatprep.subr.mxu0 0.0
        %1342 = vmatpush1.msra.mxu0 0.0
        %1343 = vmatprep.subr.mxu0 0.0
        %1344 = vmatpush1.msra.mxu0 0.0
        %1345 = vmatprep.subr.mxu0 0.0
        %1346 = vmatpush1.msra.mxu0 0.0
        %1347 = vmatprep.subr.mxu0 0.0
        %1348 = vmatpush1.msra.mxu0 0.0
        %1349 = vmatprep.subr.mxu0 0.0
        %1350 = vmatpush1.msra.mxu0 0.0
        %1351 = vmatprep.subr.mxu0 0.0
        %1352 = vmatpush1.msra.mxu0 0.0
        %1353 = vmatprep.subr.mxu0 0.0
        %1354 = vmatpush1.msra.mxu0 0.0
        %1355 = vmatprep.subr.mxu0 %v1318
        %1356 = vmatpush1.msra.mxu0 %v1317
        %1357 = vmatprep.subr.mxu0 %v1182
        %1358 = vmatpush1.msra.mxu0 %v1181
        %1359 = vmatprep.subr.mxu0 %v1174
        %1360 = vmatpush1.msra.mxu0 %v1173
        %1361 = vmatprep.subr.mxu0 0.0
        %1362 = vmatpush2.msra.mxu0 0.0
        %1363 = vmatprep.subr.mxu0 0.0
        %1364 = vmatpush2.msra.mxu0 0.0
        %1365 = vmatprep.subr.mxu0 0.0
        %1366 = vmatpush2.msra.mxu0 0.0
        %1367 = vmatprep.subr.mxu0 0.0
        %1368 = vmatpush2.msra.mxu0 0.0
        %1369 = vmatprep.subr.mxu0 0.0
        %1370 = vmatpush2.msra.mxu0 0.0
        %1371 = vmatprep.subr.mxu0 0.0
        %1372 = vmatpush2.msra.mxu0 0.0
        %1373 = vmatprep.subr.mxu0 0.0
        %1374 = vmatpush2.msra.mxu0 0.0
        %1375 = vmatprep.subr.mxu0 0.0
        %1376 = vmatpush2.msra.mxu0 0.0
        %1377 = vmatprep.subr.mxu0 0.0
        %1378 = vmatpush2.msra.mxu0 0.0
        %1379 = vmatprep.subr.mxu0 0.0
        %1380 = vmatpush2.msra.mxu0 0.0
        %1381 = vmatprep.subr.mxu0 0.0
        %1382 = vmatpush2.msra.mxu0 0.0
        %1383 = vmatprep.subr.mxu0 0.0
        %1384 = vmatpush2.msra.mxu0 0.0
        %1385 = vmatprep.subr.mxu0 0.0
        %1386 = vmatpush2.msra.mxu0 0.0
        %1387 = vmatprep.subr.mxu0 0.0
        %1388 = vmatpush2.msra.mxu0 0.0
        %1389 = vmatprep.subr.mxu0 0.0
        %1390 = vmatpush2.msra.mxu0 0.0
        %1391 = vmatprep.subr.mxu0 0.0
        %1392 = vmatpush2.msra.mxu0 0.0
        %1393 = vmatprep.mubr.f32.mxu0 0.0
        %1394 = vmatmul.mubr.f32.gmra.mxu0 %v1327
        %v1395 = vpop.f32.mrf.mxu0
        %v1396 = vadd.f32 0.0, %v1395
        %v1397 = vpop.f32.mrf.mxu0
        %v1398 = vadd.f32 0.0, %v1397
        %1399 = vdwg.mxu0
        %1400 = vmatprep.subr.mxu0 0.0
        %1401 = vmatpush1.msra.mxu0 0.0
        %1402 = vmatprep.subr.mxu0 0.0
        %1403 = vmatpush1.msra.mxu0 0.0
        %1404 = vmatprep.subr.mxu0 0.0
        %1405 = vmatpush1.msra.mxu0 0.0
        %1406 = vmatprep.subr.mxu0 0.0
        %1407 = vmatpush1.msra.mxu0 0.0
        %1408 = vmatprep.subr.mxu0 0.0
        %1409 = vmatpush1.msra.mxu0 0.0
        %1410 = vmatprep.subr.mxu0 0.0
        %1411 = vmatpush1.msra.mxu0 0.0
        %1412 = vmatprep.subr.mxu0 0.0
        %1413 = vmatpush1.msra.mxu0 0.0
        %1414 = vmatprep.subr.mxu0 0.0
        %1415 = vmatpush1.msra.mxu0 0.0
        %1416 = vmatprep.subr.mxu0 0.0
        %1417 = vmatpush1.msra.mxu0 0.0
        %1418 = vmatprep.subr.mxu0 0.0
        %1419 = vmatpush1.msra.mxu0 0.0
        %1420 = vmatprep.subr.mxu0 0.0
        %1421 = vmatpush1.msra.mxu0 0.0
        %1422 = vmatprep.subr.mxu0 0.0
        %1423 = vmatpush1.msra.mxu0 0.0
        %1424 = vmatprep.subr.mxu0 0.0
        %1425 = vmatpush1.msra.mxu0 0.0
        %1426 = vmatprep.subr.mxu0 %v1320
        %1427 = vmatpush1.msra.mxu0 %v1319
        %1428 = vmatprep.subr.mxu0 %v1184
        %1429 = vmatpush1.msra.mxu0 %v1183
        %1430 = vmatprep.subr.mxu0 %v1176
        %1431 = vmatpush1.msra.mxu0 %v1175
        %1432 = vmatprep.subr.mxu0 0.0
        %1433 = vmatpush2.msra.mxu0 0.0
        %1434 = vmatprep.subr.mxu0 0.0
        %1435 = vmatpush2.msra.mxu0 0.0
        %1436 = vmatprep.subr.mxu0 0.0
        %1437 = vmatpush2.msra.mxu0 0.0
        %1438 = vmatprep.subr.mxu0 0.0
        %1439 = vmatpush2.msra.mxu0 0.0
        %1440 = vmatprep.subr.mxu0 0.0
        %1441 = vmatpush2.msra.mxu0 0.0
        %1442 = vmatprep.subr.mxu0 0.0
        %1443 = vmatpush2.msra.mxu0 0.0
        %1444 = vmatprep.subr.mxu0 0.0
        %1445 = vmatpush2.msra.mxu0 0.0
        %1446 = vmatprep.subr.mxu0 0.0
        %1447 = vmatpush2.msra.mxu0 0.0
        %1448 = vmatprep.subr.mxu0 0.0
        %1449 = vmatpush2.msra.mxu0 0.0
        %1450 = vmatprep.subr.mxu0 0.0
        %1451 = vmatpush2.msra.mxu0 0.0
        %1452 = vmatprep.subr.mxu0 0.0
        %1453 = vmatpush2.msra.mxu0 0.0
        %1454 = vmatprep.subr.mxu0 0.0
        %1455 = vmatpush2.msra.mxu0 0.0
        %1456 = vmatprep.subr.mxu0 0.0
        %1457 = vmatpush2.msra.mxu0 0.0
        %1458 = vmatprep.subr.mxu0 0.0
        %1459 = vmatpush2.msra.mxu0 0.0
        %1460 = vmatprep.subr.mxu0 0.0
        %1461 = vmatpush2.msra.mxu0 0.0
        %1462 = vmatprep.subr.mxu0 0.0
        %1463 = vmatpush2.msra.mxu0 0.0
        %1464 = vmatprep.mubr.f32.mxu0 0.0
        %1465 = vmatmul.mubr.f32.gmra.mxu0 %v1327
        %v1466 = vpop.f32.mrf.mxu0
        %v1467 = vadd.f32 0.0, %v1466
        %v1468 = vpop.f32.mrf.mxu0
        %v1469 = vadd.f32 0.0, %v1468
        %1470 = vdwg.mxu0
        %1471 = vmatprep.subr.mxu0 0.0
        %1472 = vmatpush1.msra.mxu0 0.0
        %1473 = vmatprep.subr.mxu0 0.0
        %1474 = vmatpush1.msra.mxu0 0.0
        %1475 = vmatprep.subr.mxu0 0.0
        %1476 = vmatpush1.msra.mxu0 0.0
        %1477 = vmatprep.subr.mxu0 0.0
        %1478 = vmatpush1.msra.mxu0 0.0
        %1479 = vmatprep.subr.mxu0 0.0
        %1480 = vmatpush1.msra.mxu0 0.0
        %1481 = vmatprep.subr.mxu0 0.0
        %1482 = vmatpush1.msra.mxu0 0.0
        %1483 = vmatprep.subr.mxu0 0.0
        %1484 = vmatpush1.msra.mxu0 0.0
        %1485 = vmatprep.subr.mxu0 0.0
        %1486 = vmatpush1.msra.mxu0 0.0
        %1487 = vmatprep.subr.mxu0 0.0
        %1488 = vmatpush1.msra.mxu0 0.0
        %1489 = vmatprep.subr.mxu0 0.0
        %1490 = vmatpush1.msra.mxu0 0.0
        %1491 = vmatprep.subr.mxu0 0.0
        %1492 = vmatpush1.msra.mxu0 0.0
        %1493 = vmatprep.subr.mxu0 0.0
        %1494 = vmatpush1.msra.mxu0 0.0
        %1495 = vmatprep.subr.mxu0 0.0
        %1496 = vmatpush1.msra.mxu0 0.0
        %1497 = vmatprep.subr.mxu0 %v1322
        %1498 = vmatpush1.msra.mxu0 %v1321
        %1499 = vmatprep.subr.mxu0 %v1186
        %1500 = vmatpush1.msra.mxu0 %v1185
        %1501 = vmatprep.subr.mxu0 %v1178
        %1502 = vmatpush1.msra.mxu0 %v1177
        %1503 = vmatprep.subr.mxu0 0.0
        %1504 = vmatpush2.msra.mxu0 0.0
        %1505 = vmatprep.subr.mxu0 0.0
        %1506 = vmatpush2.msra.mxu0 0.0
        %1507 = vmatprep.subr.mxu0 0.0
        %1508 = vmatpush2.msra.mxu0 0.0
        %1509 = vmatprep.subr.mxu0 0.0
        %1510 = vmatpush2.msra.mxu0 0.0
        %1511 = vmatprep.subr.mxu0 0.0
        %1512 = vmatpush2.msra.mxu0 0.0
        %1513 = vmatprep.subr.mxu0 0.0
        %1514 = vmatpush2.msra.mxu0 0.0
        %1515 = vmatprep.subr.mxu0 0.0
        %1516 = vmatpush2.msra.mxu0 0.0
        %1517 = vmatprep.subr.mxu0 0.0
        %1518 = vmatpush2.msra.mxu0 0.0
        %1519 = vmatprep.subr.mxu0 0.0
        %1520 = vmatpush2.msra.mxu0 0.0
        %1521 = vmatprep.subr.mxu0 0.0
        %1522 = vmatpush2.msra.mxu0 0.0
        %1523 = vmatprep.subr.mxu0 0.0
        %1524 = vmatpush2.msra.mxu0 0.0
        %1525 = vmatprep.subr.mxu0 0.0
        %1526 = vmatpush2.msra.mxu0 0.0
        %1527 = vmatprep.subr.mxu0 0.0
        %1528 = vmatpush2.msra.mxu0 0.0
        %1529 = vmatprep.subr.mxu0 0.0
        %1530 = vmatpush2.msra.mxu0 0.0
        %1531 = vmatprep.subr.mxu0 0.0
        %1532 = vmatpush2.msra.mxu0 0.0
        %1533 = vmatprep.subr.mxu0 0.0
        %1534 = vmatpush2.msra.mxu0 0.0
        %1535 = vmatprep.mubr.f32.mxu0 0.0
        %1536 = vmatmul.mubr.f32.gmra.mxu0 %v1327
        %v1537 = vpop.f32.mrf.mxu0
        %v1538 = vadd.f32 0.0, %v1537
        %v1539 = vpop.f32.mrf.mxu0
        %v1540 = vadd.f32 0.0, %v1539
        %1541 = vdwg.mxu0
        %1542 = vmatprep.subr.mxu0 0.0
        %1543 = vmatpush1.msra.mxu0 0.0
        %1544 = vmatprep.subr.mxu0 0.0
        %1545 = vmatpush1.msra.mxu0 0.0
        %1546 = vmatprep.subr.mxu0 0.0
        %1547 = vmatpush1.msra.mxu0 0.0
        %1548 = vmatprep.subr.mxu0 0.0
        %1549 = vmatpush1.msra.mxu0 0.0
        %1550 = vmatprep.subr.mxu0 0.0
        %1551 = vmatpush1.msra.mxu0 0.0
        %1552 = vmatprep.subr.mxu0 0.0
        %1553 = vmatpush1.msra.mxu0 0.0
        %1554 = vmatprep.subr.mxu0 0.0
        %1555 = vmatpush1.msra.mxu0 0.0
        %1556 = vmatprep.subr.mxu0 0.0
        %1557 = vmatpush1.msra.mxu0 0.0
        %1558 = vmatprep.subr.mxu0 0.0
        %1559 = vmatpush1.msra.mxu0 0.0
        %1560 = vmatprep.subr.mxu0 0.0
        %1561 = vmatpush1.msra.mxu0 0.0
        %1562 = vmatprep.subr.mxu0 0.0
        %1563 = vmatpush1.msra.mxu0 0.0
        %1564 = vmatprep.subr.mxu0 0.0
        %1565 = vmatpush1.msra.mxu0 0.0
        %1566 = vmatprep.subr.mxu0 0.0
        %1567 = vmatpush1.msra.mxu0 0.0
        %1568 = vmatprep.subr.mxu0 %v1324
        %1569 = vmatpush1.msra.mxu0 %v1323
        %1570 = vmatprep.subr.mxu0 %v1188
        %1571 = vmatpush1.msra.mxu0 %v1187
        %1572 = vmatprep.subr.mxu0 %v1180
        %1573 = vmatpush1.msra.mxu0 %v1179
        %1574 = vmatprep.subr.mxu0 0.0
        %1575 = vmatpush2.msra.mxu0 0.0
        %1576 = vmatprep.subr.mxu0 0.0
        %1577 = vmatpush2.msra.mxu0 0.0
        %1578 = vmatprep.subr.mxu0 0.0
        %1579 = vmatpush2.msra.mxu0 0.0
        %1580 = vmatprep.subr.mxu0 0.0
        %1581 = vmatpush2.msra.mxu0 0.0
        %1582 = vmatprep.subr.mxu0 0.0
        %1583 = vmatpush2.msra.mxu0 0.0
        %1584 = vmatprep.subr.mxu0 0.0
        %1585 = vmatpush2.msra.mxu0 0.0
        %1586 = vmatprep.subr.mxu0 0.0
        %1587 = vmatpush2.msra.mxu0 0.0
        %1588 = vmatprep.subr.mxu0 0.0
        %1589 = vmatpush2.msra.mxu0 0.0
        %1590 = vmatprep.subr.mxu0 0.0
        %1591 = vmatpush2.msra.mxu0 0.0
        %1592 = vmatprep.subr.mxu0 0.0
        %1593 = vmatpush2.msra.mxu0 0.0
        %1594 = vmatprep.subr.mxu0 0.0
        %1595 = vmatpush2.msra.mxu0 0.0
        %1596 = vmatprep.subr.mxu0 0.0
        %1597 = vmatpush2.msra.mxu0 0.0
        %1598 = vmatprep.subr.mxu0 0.0
        %1599 = vmatpush2.msra.mxu0 0.0
        %1600 = vmatprep.subr.mxu0 0.0
        %1601 = vmatpush2.msra.mxu0 0.0
        %1602 = vmatprep.subr.mxu0 0.0
        %1603 = vmatpush2.msra.mxu0 0.0
        %1604 = vmatprep.subr.mxu0 0.0
        %1605 = vmatpush2.msra.mxu0 0.0
        %1606 = vmatprep.mubr.f32.mxu0 0.0
        %1607 = vmatmul.mubr.f32.gmra.mxu0 %v1327
        %v1608 = vpop.f32.mrf.mxu0
        %v1609 = vadd.f32 0.0, %v1608
        %v1610 = vpop.f32.mrf.mxu0
        %v1611 = vadd.f32 0.0, %v1610
        %1612 = vdwg.mxu0
        %v1613 = vadd.f32 %v318, %v1396
        %v1614 = vadd.f32 %v319, %v1398
        %v1615 = vadd.f32 %v320, %v1467
        %v1616 = vadd.f32 %v321, %v1469
        %v1617 = vadd.f32 %v322, %v1538
        %v1618 = vadd.f32 %v323, %v1540
        %v1619 = vadd.f32 %v324, %v1609
        %v1620 = vadd.f32 %v325, %v1611
        %1622 = vset.pattern.permute.xlu0 0
        %1623 = vperm.xlu0 %1622, %v334
        %v1624 = vpop.permute.xlu0 %1623
        %v1626 = vadd.f32 %v1613, %v1624
        %v1627 = vadd.f32 %v1614, %v1624
        %v1628 = vadd.f32 %v1615, %v1624
        %v1629 = vadd.f32 %v1616, %v1624
        %v1630 = vadd.f32 %v1617, %v1624
        %v1631 = vadd.f32 %v1618, %v1624
        %v1632 = vadd.f32 %v1619, %v1624
        %v1633 = vadd.f32 %v1620, %v1624
        %vm1634 = vcmp.ge.f32.partialorder %v1626, 0.0
        %vm1635 = vcmp.ge.f32.partialorder %v1627, 0.0
        %vm1636 = vcmp.ge.f32.partialorder %v1628, 0.0
        %vm1637 = vcmp.ge.f32.partialorder %v1629, 0.0
        %vm1638 = vcmp.ge.f32.partialorder %v1630, 0.0
        %vm1639 = vcmp.ge.f32.partialorder %v1631, 0.0
        %vm1640 = vcmp.ge.f32.partialorder %v1632, 0.0
        %vm1641 = vcmp.ge.f32.partialorder %v1633, 0.0
        %v1642 = vmul.f32 %v1626, 0.2
        %v1643 = vmul.f32 %v1627, 0.2
        %v1644 = vmul.f32 %v1628, 0.2
        %v1645 = vmul.f32 %v1629, 0.2
        %v1646 = vmul.f32 %v1630, 0.2
        %v1647 = vmul.f32 %v1631, 0.2
        %v1648 = vmul.f32 %v1632, 0.2
        %v1649 = vmul.f32 %v1633, 0.2
        %v1650 = vsel %vm1634, %v1626, %v1642
        %v1651 = vsel %vm1635, %v1627, %v1643
        %v1652 = vsel %vm1636, %v1628, %v1644
        %v1653 = vsel %vm1637, %v1629, %v1645
        %v1654 = vsel %vm1638, %v1630, %v1646
        %v1655 = vsel %vm1639, %v1631, %v1647
        %v1656 = vsel %vm1640, %v1632, %v1648
        %v1657 = vsel %vm1641, %v1633, %v1649
        %1658 = vst [vmem:[%s297] sm:$0xff] %v1650
        %1659 = vst [vmem:[%s297 + $0x8] sm:$0xff] %v1651
        %1660 = vst [vmem:[%s297 + $0x10] sm:$0xff] %v1652
        %1661 = vst [vmem:[%s297 + $0x18] sm:$0xff] %v1653
        %1662 = vst [vmem:[%s297 + $0x20] sm:$0xff] %v1654
        %1663 = vst [vmem:[%s297 + $0x28] sm:$0xff] %v1655
        %1664 = vst [vmem:[%s297 + $0x30] sm:$0xff] %v1656
        %1665 = vst [vmem:[%s297 + $0x38] sm:$0xff] %v1657
        %s1666 = sand.u32 %s185, 1
        %s1667 = scalar_lea.sflag [#allocation3], %s1666
        %s1668 = sand.u32 %s185, 1
        %s1669 = smul.addr %s1668, 64
        %s1670 = scalar_lea.vmem [#allocation2], %s1669
        // Predicated region
        $region45: #{_lambda_.1} parent=43 // pred_check
          %p1671 = pneg %p195
        $region46: #{_lambda_.1} parent=43 // pred_check_branch
          %1673 = sbr.rel (%p1671) target = $region48
        $region47: #{_lambda_.1} parent=43 // pred_region
          %s1674 = smul.u32 8, %s25
          %s1676 = ssub.s32 1024, 1024
          %1677 = vsyncadd %s1667, %s1676
          %s1678 = smul.addr %s24, 16
          %s1679 = sadd.s32 %s1674, %s1678
          %s1680 = smul.addr %s1679, 128
          %s1681 = scalar_lea.hbm %s6, %s1680
          %s1683 = sshll.u32 %s1670, 4
          %s1684 = int_to_ptr.vmem [resolvable:$true] %s1683
          %1686 = dma.vmem_to_hbm [thread:$0]  %s1684, 1024, %s1681, %s1667
        $region48: #{_lambda_.1} parent=43 // pred_fallthru
          _
      $region44: #{_lambda_.1} parent=5 // pred_fallthru
        _
      %p1687 = scmp.le.s32.totalorder 2, %s15
      // Predicated region
      $region49: #{_lambda_.1} parent=5 // pred_check
        %p1688 = pneg %p1687
      $region50: #{_lambda_.1} parent=5 // pred_check_branch
        %1690 = sbr.rel (%p1688) target = $region52
      $region51: #{_lambda_.1} parent=5 // pred_region
        %s1691 = ssub.s32 %s15, 2
        // Predicated region
        $region53: #{_lambda_.1} parent=51 // pred_check
          %p1692 = pneg %p201
        $region54: #{_lambda_.1} parent=51 // pred_check_branch
          %1694 = sbr.rel (%p1692) target = $region56
        $region55: #{_lambda_.1} parent=51 // pred_region
          %s1695 = sand.u32 %s186, 1
          %s1696 = scalar_lea.sflag [#allocation3], %s1695
          %s1697 = sand.u32 %s186, 1
          %s1698 = smul.addr %s1697, 64
          %s1699 = scalar_lea.vmem [#allocation2], %s1698
          %1700 = dma.done %s1696, 1024
        $region56: #{_lambda_.1} parent=51 // pred_fallthru
          _
      $region52: #{_lambda_.1} parent=5 // pred_fallthru
        _
    $region6: #{_lambda_.1} parent=1 // loop_footer
      %s19 = sadd.s32 1, %s15
    $region7: #{_lambda_.1} parent=1 // loop_footer_branch
      %14 = sbr.rel target = $region3
    $region8: #{_lambda_.1} parent=1 // loop_exit
      _
    %1701 = vsyncpa [#allocation3], 1
    %s1702 = scalar_lea.sflag [#allocation3], 1
    %1703 = vsyncpa %s1702, 1

</llo_original>
